<compile_context>
chip_gen: v6e
topology: v6e:2x2x1
jax: 0.10.0
libtpu: 0.0.40
codegen_flags: <defaults>
</compile_context>

<pallas_src>
import functools

import jax
import jax.numpy as jnp
from jax.experimental import pallas as pl
from jax.experimental.pallas import tpu as pltpu


# --------------------------------------------------------------------------- #
# Kernel
# --------------------------------------------------------------------------- #
def _time_embedding_kernel(s_ref, wA_ref, wB_ref, b_ref, kqf_ref, kqsb_ref,
                           out_ref, *, use_mxu):
    # s_ref   : (1, 2, D, TL) f32   channel 0 = x, channel 1 = index (d-major tiles)
    # wA_ref  : (2, 2, dm)    f32   [mlp_w1^T, h_w1^T]           (VPU, depth-2)
    # wB_ref  : (4, dm, dm)   f32/bf16 [mlp_w2^T, g_w1^T, g_w2^T, h_w2^T]  (a @ w)
    # b_ref   : (6, dm)       f32   [mlp_b1, mlp_b2, g_b1, g_b2, h_b1, h_b2]
    # kqf_ref : (dm, nh)      f32   k_wf^T @ Q^T   (Q folded into K, f32)
    # kqsb_ref: (3, nh)       f32   [k_ws^T @ Q^T (2 rows), k_b @ Q^T]
    # out_ref : (1, TL, nh*dm) f32  store layout (per-head dm-wide slabs)
    _, _, D, TL = s_ref.shape
    dm = wB_ref.shape[-1]
    nh = kqf_ref.shape[-1]
    N = D * TL

    s = s_ref[0]                                   # (2, D, TL)
    # Only relayout in the kernel: scalar channels -> element columns (2*N elems).
    x3 = s[0][:, :, None]                          # (D, TL, 1)
    i3 = s[1][:, :, None]                          # (D, TL, 1)

    wA = wA_ref[...]                               # (2, 2, dm)
    wB = wB_ref[...]                               # (4, dm, dm)
    bias = b_ref[...]                              # (6, dm)
    kqf = kqf_ref[...]                             # (dm, nh)
    kqsb = kqsb_ref[...]                           # (3, nh)

    relu = lambda v: jnp.maximum(v, 0.0)

    def lin2(widx, bidx):
        # input-dim-2 linear as two broadcast FMAs on the VPU -> (D, TL, dm)
        w = wA[widx]                               # (2, dm)
        return (x3 * w[0:1, :].reshape(1, 1, dm)
                + i3 * w[1:2, :].reshape(1, 1, dm)
                + bias[bidx:bidx + 1, :].reshape(1, 1, dm))

    def dense(a2, w, brow=None, mxu_ok=True):
        # a2: (R, K) f32 ; w: (K, F) "a @ w" orientation ; brow: (1, F) or None
        K = a2.shape[-1]
        if use_mxu and mxu_ok:
            # bf16-fed MXU, f32 accumulation (only enabled when dm >= 64)
            r = jnp.dot(a2.astype(w.dtype), w, preferred_element_type=jnp.float32)
        elif K <= 32:
            # small contraction: unrolled f32 VPU FMAs, no MXU / bf16 casts
            wf = w.astype(jnp.float32)
            r = a2[:, 0:1] * wf[0:1, :]
            for k in range(1, K):
                r = r + a2[:, k:k + 1] * wf[k:k + 1, :]
        else:
            r = jnp.dot(a2, w.astype(jnp.float32),
                        preferred_element_type=jnp.float32)
        if brow is not None:
            r = r + brow
        return r

    # ---- fs = g(mlp(s).mean(-2))   (mask=None path) ----------------------
    t = relu(lin2(0, 0))                                           # (D, TL, dm)
    fs_all = dense(t.reshape(N, dm), wB[0], bias[1:2, :])          # (N, dm)
    fs = fs_all.reshape(D, TL, dm).sum(axis=0) * (1.0 / D)         # (TL, dm)
    fs = dense(relu(dense(fs, wB[1], bias[2:3, :])),
               wB[2], bias[3:4, :])                                # (TL, dm)

    # ---- e = K([fs, s]) @ Q^T with Q folded into K (trace-time, f32) -----
    e_f = dense(fs, kqf, kqsb[2:3, :], mxu_ok=False)               # (TL, nh) f32
    e_s3 = (x3 * kqsb[0:1, :].reshape(1, 1, nh)
            + i3 * kqsb[1:2, :].reshape(1, 1, nh))                 # (D, TL, nh)
    e3 = e_s3 + e_f[None, :, :]                                    # (D, TL, nh)

    # per-(l, head) softmax over D: leading-axis max / sum (no relayout)
    p3 = jnp.exp(e3 - jnp.max(e3, axis=0, keepdims=True))          # (D, TL, nh)
    inv = pl.reciprocal(jnp.sum(p3, axis=0), approx=True)          # (TL, nh)

    # ---- hs = h(s) --------------------------------------------------------
    t = relu(lin2(1, 4))                                           # (D, TL, dm)
    hs3 = dense(t.reshape(N, dm), wB[3], bias[5:6, :]).reshape(D, TL, dm)

    # ---- r[l, m*dm + k] = sum_d softmax(e)[d,l,m] * hs[d,l,k] -------------
    # Unrolled over heads; each head is D broadcast-FMAs on (TL, dm) tiles reduced
    # over the leading axis; slabs concatenated into the (TL, nh*dm) store layout.
    slabs = []
    for m in range(nh):
        slab = jnp.sum(p3[:, :, m:m + 1] * hs3, axis=0)            # (TL, dm)
        slabs.append(slab * inv[:, m:m + 1])
    out_ref[...] = jnp.concatenate(slabs, axis=-1).reshape(1, TL, nh * dm)

    # TODO(synk): mask branch (masked mean + masked_fill before softmax) not
    # implemented; this kernel covers the mask=None path of the PyTorch forward.


# --------------------------------------------------------------------------- #
# Wrapper
# --------------------------------------------------------------------------- #
def _choose_tl(L, D, target_rows):
    """L-tile: whole L if it fits, else the largest multiple of 8 within budget."""
    if L * D <= target_rows:
        return L
    tl = max(8, (target_rows // max(D, 1)) // 8 * 8)
    return min(tl, L)


def time_embedding_forward(x, index, params, *, compute_dtype=jnp.float32,
                           target_rows=2048):
    B, L, D = x.shape
    nh, dm = params["Q"].shape
    hidden = nh * dm

    TL = _choose_tl(L, D, target_rows)
    num_lt = pl.cdiv(L, TL)
    L_pad = num_lt * TL
    G = B * num_lt
    use_mxu = (jnp.dtype(compute_dtype) == jnp.dtype(jnp.bfloat16)) and dm >= 64
    w_dtype = jnp.bfloat16 if use_mxu else jnp.float32

    # -- input: lane-dense d-major tiles (G, 2, D, TL); pad L (per-l independent) --
    s = jnp.stack([x.astype(jnp.float32), index.astype(jnp.float32)], axis=1)
    if L_pad != L:
        s = jnp.pad(s, ((0, 0), (0, 0), (0, L_pad - L), (0, 0)))
    s = s.transpose(0, 1, 3, 2)                                    # (B, 2, D, L_pad)
    s = s.reshape(B, 2, D, num_lt, TL).transpose(0, 3, 1, 2, 4)    # (B, nlt, 2, D, TL)
    s = s.reshape(G, 2, D, TL)

    # -- weights: fold Q into K (f32), pack the rest into a few stacked arrays --
    kT = params["k_w"].T.astype(jnp.float32)                       # (dm+2, dm)
    QT = params["Q"].T.astype(jnp.float32)                         # (dm, nh)
    kq_f = (kT[:dm, :] @ QT).astype(jnp.float32)                   # (dm, nh)
    kq_s = (kT[dm:, :] @ QT).astype(jnp.float32)                   # (2, nh)
    kq_b = (params["k_b"].astype(jnp.float32) @ QT)                # (nh,)
    kq_sb = jnp.concatenate([kq_s, kq_b.reshape(1, nh)], axis=0)   # (3, nh)

    wA = jnp.stack([params["mlp_w1"].T, params["h_w1"].T]).astype(jnp.float32)
    wB = jnp.stack([params["mlp_w2"].T, params["g_w1"].T,
                    params["g_w2"].T, params["h_w2"].T]).astype(w_dtype)
    bstack = jnp.stack([params["mlp_b1"], params["mlp_b2"], params["g_b1"],
                        params["g_b2"], params["h_b1"], params["h_b2"]]
                       ).astype(jnp.float32)

    in_specs = [
        pl.BlockSpec((1, 2, D, TL), lambda g: (g, 0, 0, 0)),
        pl.BlockSpec(wA.shape, lambda g: (0, 0, 0)),
        pl.BlockSpec(wB.shape, lambda g: (0, 0, 0)),
        pl.BlockSpec(bstack.shape, lambda g: (0, 0)),
        pl.BlockSpec(kq_f.shape, lambda g: (0, 0)),
        pl.BlockSpec(kq_sb.shape, lambda g: (0, 0)),
    ]
    out_spec = pl.BlockSpec((1, TL, hidden), lambda g: (g, 0, 0))

    out = pl.pallas_call(
        functools.partial(_time_embedding_kernel, use_mxu=use_mxu),
        out_shape=jax.ShapeDtypeStruct((G, TL, hidden), jnp.float32),
        grid_spec=pltpu.PrefetchScalarGridSpec(
            num_scalar_prefetch=0,
            grid=(G,),
            in_specs=in_specs,
            out_specs=out_spec,
        ),
        compiler_params=pltpu.CompilerParams(
            dimension_semantics=("parallel",),
            # Per-step footprint is small now that the 4-D temp is gone; 32 MiB
            # stays within v7x's scoped default and well under v5e/v6e physical.
            vmem_limit_bytes=32 * 1024 * 1024),
    )(s, wA, wB, bstack, kq_f, kq_sb)

    out = out.reshape(B, num_lt * TL, hidden)
    if L_pad != L:
        out = out[:, :L, :]
    return out


# --------------------------------------------------------------------------- #
# Reference / params / demo
# --------------------------------------------------------------------------- #
def init_params(key, hidden_size, n_heads):
    dm = hidden_size // n_heads
    ks = jax.random.split(key, 8)

    def lin(k, out_f, in_f):
        kw, kb = jax.random.split(k)
        w = 0.1 * jax.random.normal(kw, (out_f, in_f), jnp.float32)
        b = 0.1 * jax.random.normal(kb, (out_f,), jnp.float32)
        return w, b

    p = {}
    p["mlp_w1"], p["mlp_b1"] = lin(ks[0], dm, 2)
    p["mlp_w2"], p["mlp_b2"] = lin(ks[1], dm, dm)
    p["g_w1"], p["g_b1"] = lin(ks[2], dm, dm)
    p["g_w2"], p["g_b2"] = lin(ks[3], dm, dm)
    p["k_w"], p["k_b"] = lin(ks[4], dm, dm + 2)
    p["h_w1"], p["h_b1"] = lin(ks[5], dm, 2)
    p["h_w2"], p["h_b2"] = lin(ks[6], dm, dm)
    p["Q"] = 0.1 * jax.random.normal(ks[7], (n_heads, dm), jnp.float32)
    return p


def reference_forward(x, index, params):
    """Pure-JAX transcription of the PyTorch forward (mask=None path)."""
    B, L, D = x.shape
    nh, dm = params["Q"].shape
    s = jnp.stack([x, index], axis=-1)                          # (B, L, D, 2)
    lin = lambda v, w, b: v @ w.T + b
    t = jax.nn.relu(lin(s, params["mlp_w1"], params["mlp_b1"]))
    fs = lin(t, params["mlp_w2"], params["mlp_b2"]).mean(-2)    # (B, L, dm)
    t = jax.nn.relu(lin(fs, params["g_w1"], params["g_b1"]))
    fs = lin(t, params["g_w2"], params["g_b2"])
    fs = jnp.broadcast_to(fs[:, :, None, :], (B, L, D, dm))
    fcat = jnp.concatenate([fs, s], axis=-1)
    Z = lin(fcat, params["k_w"], params["k_b"])
    e = jnp.einsum('blsd,md->blsm', Z, params["Q"])
    e = jax.nn.softmax(e, axis=-2)
    t = jax.nn.relu(lin(s, params["h_w1"], params["h_b1"]))
    hs = lin(t, params["h_w2"], params["h_b2"])
    r = jnp.einsum('blsd,blsm->blmd', hs, e)
    return r.reshape(B, -1, nh * dm)


if __name__ == "__main__":
    key = jax.random.PRNGKey(0)
    kx, kp, kp2 = jax.random.split(key, 3)

    B, L, D = 2, 8, 4
    x = jax.random.normal(kx, (B, L, D), jnp.float32)
    index = jnp.broadcast_to(
        (jnp.arange(L, dtype=jnp.float32) / L)[None, :, None], (B, L, D))

    # Config A: hidden=32, nh=4 (dm=8) -> f32, unrolled-VPU contraction path.
    hidden_a, nh_a = 32, 4
    params_a = init_params(kp, hidden_a, nh_a)
    ref_a = reference_forward(x, index, params_a)
    out_a = jax.block_until_ready(time_embedding_forward(x, index, params_a))
    assert out_a.shape == (B, L, hidden_a), out_a.shape
    assert jnp.allclose(out_a, ref_a, atol=5e-3, rtol=5e-3), \
        float(jnp.max(jnp.abs(out_a - ref_a)))

    # Config B: hidden=256, nh=4 (dm=64) -> bf16-fed MXU with f32 accumulation.
    hidden_b, nh_b = 256, 4
    params_b = init_params(kp2, hidden_b, nh_b)
    ref_b = reference_forward(x, index, params_b)
    out_b = jax.block_until_ready(
        time_embedding_forward(x, index, params_b, compute_dtype=jnp.bfloat16))
    assert out_b.shape == (B, L, hidden_b), out_b.shape
    assert jnp.allclose(out_b, ref_b, atol=3e-2, rtol=3e-2), \
        float(jnp.max(jnp.abs(out_b - ref_b)))

    print("KERNEL_OK")
</pallas_src>

<mosaic_0001>
module attributes {stable_mosaic.version = 11 : i64} {
  func.func @_time_embedding_kernel(%arg0: i32, %arg1: memref<1x2x4x8xf32, #tpu.memory_space<vmem>>, %arg2: memref<2x2x8xf32, #tpu.memory_space<vmem>>, %arg3: memref<4x8x8xf32, #tpu.memory_space<vmem>>, %arg4: memref<6x8xf32, #tpu.memory_space<vmem>>, %arg5: memref<8x4xf32, #tpu.memory_space<vmem>>, %arg6: memref<3x4xf32, #tpu.memory_space<vmem>>, %arg7: memref<1x8x32xf32, #tpu.memory_space<vmem>>) attributes {dimension_semantics = [#tpu.dimension_semantics<parallel>], iteration_bounds = array<i64: 2>, scalar_prefetch = 0 : i64, scratch_operands = 0 : i64, tpu.core_type = #tpu.core_type<tc>, window_params = [{transform_indices = @transform_0, window_bounds = array<i64: 1, 2, 4, 8>}, {pipeline_mode = #tpu.pipeline_mode<synchronous>, transform_indices = @transform_1, window_bounds = array<i64: 2, 2, 8>}, {pipeline_mode = #tpu.pipeline_mode<synchronous>, transform_indices = @transform_2, window_bounds = array<i64: 4, 8, 8>}, {pipeline_mode = #tpu.pipeline_mode<synchronous>, transform_indices = @transform_3, window_bounds = array<i64: 6, 8>}, {pipeline_mode = #tpu.pipeline_mode<synchronous>, transform_indices = @transform_4, window_bounds = array<i64: 8, 4>}, {pipeline_mode = #tpu.pipeline_mode<synchronous>, transform_indices = @transform_5, window_bounds = array<i64: 3, 4>}, {transform_indices = @transform_6, window_bounds = array<i64: 1, 8, 32>}]} {
    %c0 = arith.constant 0 : index
    %c0_0 = arith.constant 0 : index
    %c0_1 = arith.constant 0 : index
    %c0_2 = arith.constant 0 : index
    %0 = vector.load %arg1[%c0, %c0_0, %c0_1, %c0_2] : memref<1x2x4x8xf32, #tpu.memory_space<vmem>>, vector<1x2x4x8xf32>
    %1 = vector.shape_cast %0 : vector<1x2x4x8xf32> to vector<2x4x8xf32>
    %2 = vector.extract_strided_slice %1 {offsets = [0, 0, 0], sizes = [1, 4, 8], strides = [1, 1, 1]} : vector<2x4x8xf32> to vector<1x4x8xf32>
    %3 = vector.shape_cast %2 : vector<1x4x8xf32> to vector<4x8xf32>
    %4 = vector.shape_cast %3 : vector<4x8xf32> to vector<4x8x1xf32>
    %5 = vector.extract_strided_slice %1 {offsets = [1, 0, 0], sizes = [1, 4, 8], strides = [1, 1, 1]} : vector<2x4x8xf32> to vector<1x4x8xf32>
    %6 = vector.shape_cast %5 : vector<1x4x8xf32> to vector<4x8xf32>
    %7 = vector.shape_cast %6 : vector<4x8xf32> to vector<4x8x1xf32>
    %c0_3 = arith.constant 0 : index
    %c0_4 = arith.constant 0 : index
    %c0_5 = arith.constant 0 : index
    %8 = vector.load %arg2[%c0_3, %c0_4, %c0_5] : memref<2x2x8xf32, #tpu.memory_space<vmem>>, vector<2x2x8xf32>
    %c0_6 = arith.constant 0 : index
    %c0_7 = arith.constant 0 : index
    %c0_8 = arith.constant 0 : index
    %9 = vector.load %arg3[%c0_6, %c0_7, %c0_8] : memref<4x8x8xf32, #tpu.memory_space<vmem>>, vector<4x8x8xf32>
    %c0_9 = arith.constant 0 : index
    %c0_10 = arith.constant 0 : index
    %10 = vector.load %arg4[%c0_9, %c0_10] : memref<6x8xf32, #tpu.memory_space<vmem>>, vector<6x8xf32>
    %c0_11 = arith.constant 0 : index
    %c0_12 = arith.constant 0 : index
    %11 = vector.load %arg5[%c0_11, %c0_12] : memref<8x4xf32, #tpu.memory_space<vmem>>, vector<8x4xf32>
    %c0_13 = arith.constant 0 : index
    %c0_14 = arith.constant 0 : index
    %12 = vector.load %arg6[%c0_13, %c0_14] : memref<3x4xf32, #tpu.memory_space<vmem>>, vector<3x4xf32>
    %13 = vector.extract_strided_slice %8 {offsets = [0, 0, 0], sizes = [1, 2, 8], strides = [1, 1, 1]} : vector<2x2x8xf32> to vector<1x2x8xf32>
    %14 = vector.shape_cast %13 : vector<1x2x8xf32> to vector<2x8xf32>
    %15 = vector.extract_strided_slice %14 {offsets = [0, 0], sizes = [1, 8], strides = [1, 1]} : vector<2x8xf32> to vector<1x8xf32>
    %16 = vector.shape_cast %15 : vector<1x8xf32> to vector<1x1x8xf32>
    %17 = vector.broadcast %4 : vector<4x8x1xf32> to vector<4x8x8xf32>
    %18 = vector.broadcast %16 : vector<1x1x8xf32> to vector<4x8x8xf32>
    %19 = arith.mulf %17, %18 : vector<4x8x8xf32>
    %20 = vector.extract_strided_slice %14 {offsets = [1, 0], sizes = [1, 8], strides = [1, 1]} : vector<2x8xf32> to vector<1x8xf32>
    %21 = vector.shape_cast %20 : vector<1x8xf32> to vector<1x1x8xf32>
    %22 = vector.broadcast %7 : vector<4x8x1xf32> to vector<4x8x8xf32>
    %23 = vector.broadcast %21 : vector<1x1x8xf32> to vector<4x8x8xf32>
    %24 = arith.mulf %22, %23 : vector<4x8x8xf32>
    %25 = arith.addf %19, %24 : vector<4x8x8xf32>
    %26 = vector.extract_strided_slice %10 {offsets = [0, 0], sizes = [1, 8], strides = [1, 1]} : vector<6x8xf32> to vector<1x8xf32>
    %27 = vector.shape_cast %26 : vector<1x8xf32> to vector<1x1x8xf32>
    %28 = vector.broadcast %27 : vector<1x1x8xf32> to vector<4x8x8xf32>
    %29 = arith.addf %25, %28 : vector<4x8x8xf32>
    %cst = arith.constant 0.000000e+00 : f32
    %30 = vector.broadcast %cst : f32 to vector<4x8x8xf32>
    %31 = arith.maximumf %29, %30 : vector<4x8x8xf32>
    %32 = vector.shape_cast %31 : vector<4x8x8xf32> to vector<32x8xf32>
    %33 = vector.extract_strided_slice %9 {offsets = [0, 0, 0], sizes = [1, 8, 8], strides = [1, 1, 1]} : vector<4x8x8xf32> to vector<1x8x8xf32>
    %34 = vector.shape_cast %33 : vector<1x8x8xf32> to vector<8x8xf32>
    %35 = vector.extract_strided_slice %10 {offsets = [1, 0], sizes = [1, 8], strides = [1, 1]} : vector<6x8xf32> to vector<1x8xf32>
    %36 = vector.extract_strided_slice %32 {offsets = [0, 0], sizes = [32, 1], strides = [1, 1]} : vector<32x8xf32> to vector<32x1xf32>
    %37 = vector.extract_strided_slice %34 {offsets = [0, 0], sizes = [1, 8], strides = [1, 1]} : vector<8x8xf32> to vector<1x8xf32>
    %38 = vector.broadcast %36 : vector<32x1xf32> to vector<32x8xf32>
    %39 = vector.broadcast %37 : vector<1x8xf32> to vector<32x8xf32>
    %40 = arith.mulf %38, %39 : vector<32x8xf32>
    %41 = vector.extract_strided_slice %32 {offsets = [0, 1], sizes = [32, 1], strides = [1, 1]} : vector<32x8xf32> to vector<32x1xf32>
    %42 = vector.extract_strided_slice %34 {offsets = [1, 0], sizes = [1, 8], strides = [1, 1]} : vector<8x8xf32> to vector<1x8xf32>
    %43 = vector.broadcast %41 : vector<32x1xf32> to vector<32x8xf32>
    %44 = vector.broadcast %42 : vector<1x8xf32> to vector<32x8xf32>
    %45 = arith.mulf %43, %44 : vector<32x8xf32>
    %46 = arith.addf %40, %45 : vector<32x8xf32>
    %47 = vector.extract_strided_slice %32 {offsets = [0, 2], sizes = [32, 1], strides = [1, 1]} : vector<32x8xf32> to vector<32x1xf32>
    %48 = vector.extract_strided_slice %34 {offsets = [2, 0], sizes = [1, 8], strides = [1, 1]} : vector<8x8xf32> to vector<1x8xf32>
    %49 = vector.broadcast %47 : vector<32x1xf32> to vector<32x8xf32>
    %50 = vector.broadcast %48 : vector<1x8xf32> to vector<32x8xf32>
    %51 = arith.mulf %49, %50 : vector<32x8xf32>
    %52 = arith.addf %46, %51 : vector<32x8xf32>
    %53 = vector.extract_strided_slice %32 {offsets = [0, 3], sizes = [32, 1], strides = [1, 1]} : vector<32x8xf32> to vector<32x1xf32>
    %54 = vector.extract_strided_slice %34 {offsets = [3, 0], sizes = [1, 8], strides = [1, 1]} : vector<8x8xf32> to vector<1x8xf32>
    %55 = vector.broadcast %53 : vector<32x1xf32> to vector<32x8xf32>
    %56 = vector.broadcast %54 : vector<1x8xf32> to vector<32x8xf32>
    %57 = arith.mulf %55, %56 : vector<32x8xf32>
    %58 = arith.addf %52, %57 : vector<32x8xf32>
    %59 = vector.extract_strided_slice %32 {offsets = [0, 4], sizes = [32, 1], strides = [1, 1]} : vector<32x8xf32> to vector<32x1xf32>
    %60 = vector.extract_strided_slice %34 {offsets = [4, 0], sizes = [1, 8], strides = [1, 1]} : vector<8x8xf32> to vector<1x8xf32>
    %61 = vector.broadcast %59 : vector<32x1xf32> to vector<32x8xf32>
    %62 = vector.broadcast %60 : vector<1x8xf32> to vector<32x8xf32>
    %63 = arith.mulf %61, %62 : vector<32x8xf32>
    %64 = arith.addf %58, %63 : vector<32x8xf32>
    %65 = vector.extract_strided_slice %32 {offsets = [0, 5], sizes = [32, 1], strides = [1, 1]} : vector<32x8xf32> to vector<32x1xf32>
    %66 = vector.extract_strided_slice %34 {offsets = [5, 0], sizes = [1, 8], strides = [1, 1]} : vector<8x8xf32> to vector<1x8xf32>
    %67 = vector.broadcast %65 : vector<32x1xf32> to vector<32x8xf32>
    %68 = vector.broadcast %66 : vector<1x8xf32> to vector<32x8xf32>
    %69 = arith.mulf %67, %68 : vector<32x8xf32>
    %70 = arith.addf %64, %69 : vector<32x8xf32>
    %71 = vector.extract_strided_slice %32 {offsets = [0, 6], sizes = [32, 1], strides = [1, 1]} : vector<32x8xf32> to vector<32x1xf32>
    %72 = vector.extract_strided_slice %34 {offsets = [6, 0], sizes = [1, 8], strides = [1, 1]} : vector<8x8xf32> to vector<1x8xf32>
    %73 = vector.broadcast %71 : vector<32x1xf32> to vector<32x8xf32>
    %74 = vector.broadcast %72 : vector<1x8xf32> to vector<32x8xf32>
    %75 = arith.mulf %73, %74 : vector<32x8xf32>
    %76 = arith.addf %70, %75 : vector<32x8xf32>
    %77 = vector.extract_strided_slice %32 {offsets = [0, 7], sizes = [32, 1], strides = [1, 1]} : vector<32x8xf32> to vector<32x1xf32>
    %78 = vector.extract_strided_slice %34 {offsets = [7, 0], sizes = [1, 8], strides = [1, 1]} : vector<8x8xf32> to vector<1x8xf32>
    %79 = vector.broadcast %77 : vector<32x1xf32> to vector<32x8xf32>
    %80 = vector.broadcast %78 : vector<1x8xf32> to vector<32x8xf32>
    %81 = arith.mulf %79, %80 : vector<32x8xf32>
    %82 = arith.addf %76, %81 : vector<32x8xf32>
    %83 = vector.broadcast %35 : vector<1x8xf32> to vector<32x8xf32>
    %84 = arith.addf %82, %83 : vector<32x8xf32>
    %85 = vector.shape_cast %84 : vector<32x8xf32> to vector<4x8x8xf32>
    %cst_15 = arith.constant dense<0.000000e+00> : vector<8x8xf32>
    %86 = vector.multi_reduction <add>, %85, %cst_15 [0] : vector<4x8x8xf32> to vector<8x8xf32>
    %cst_16 = arith.constant 2.500000e-01 : f32
    %87 = vector.broadcast %cst_16 : f32 to vector<8x8xf32>
    %88 = arith.mulf %86, %87 : vector<8x8xf32>
    %89 = vector.extract_strided_slice %9 {offsets = [1, 0, 0], sizes = [1, 8, 8], strides = [1, 1, 1]} : vector<4x8x8xf32> to vector<1x8x8xf32>
    %90 = vector.shape_cast %89 : vector<1x8x8xf32> to vector<8x8xf32>
    %91 = vector.extract_strided_slice %10 {offsets = [2, 0], sizes = [1, 8], strides = [1, 1]} : vector<6x8xf32> to vector<1x8xf32>
    %92 = vector.extract_strided_slice %88 {offsets = [0, 0], sizes = [8, 1], strides = [1, 1]} : vector<8x8xf32> to vector<8x1xf32>
    %93 = vector.extract_strided_slice %90 {offsets = [0, 0], sizes = [1, 8], strides = [1, 1]} : vector<8x8xf32> to vector<1x8xf32>
    %94 = vector.broadcast %92 : vector<8x1xf32> to vector<8x8xf32>
    %95 = vector.broadcast %93 : vector<1x8xf32> to vector<8x8xf32>
    %96 = arith.mulf %94, %95 : vector<8x8xf32>
    %97 = vector.extract_strided_slice %88 {offsets = [0, 1], sizes = [8, 1], strides = [1, 1]} : vector<8x8xf32> to vector<8x1xf32>
    %98 = vector.extract_strided_slice %90 {offsets = [1, 0], sizes = [1, 8], strides = [1, 1]} : vector<8x8xf32> to vector<1x8xf32>
    %99 = vector.broadcast %97 : vector<8x1xf32> to vector<8x8xf32>
    %100 = vector.broadcast %98 : vector<1x8xf32> to vector<8x8xf32>
    %101 = arith.mulf %99, %100 : vector<8x8xf32>
    %102 = arith.addf %96, %101 : vector<8x8xf32>
    %103 = vector.extract_strided_slice %88 {offsets = [0, 2], sizes = [8, 1], strides = [1, 1]} : vector<8x8xf32> to vector<8x1xf32>
    %104 = vector.extract_strided_slice %90 {offsets = [2, 0], sizes = [1, 8], strides = [1, 1]} : vector<8x8xf32> to vector<1x8xf32>
    %105 = vector.broadcast %103 : vector<8x1xf32> to vector<8x8xf32>
    %106 = vector.broadcast %104 : vector<1x8xf32> to vector<8x8xf32>
    %107 = arith.mulf %105, %106 : vector<8x8xf32>
    %108 = arith.addf %102, %107 : vector<8x8xf32>
    %109 = vector.extract_strided_slice %88 {offsets = [0, 3], sizes = [8, 1], strides = [1, 1]} : vector<8x8xf32> to vector<8x1xf32>
    %110 = vector.extract_strided_slice %90 {offsets = [3, 0], sizes = [1, 8], strides = [1, 1]} : vector<8x8xf32> to vector<1x8xf32>
    %111 = vector.broadcast %109 : vector<8x1xf32> to vector<8x8xf32>
    %112 = vector.broadcast %110 : vector<1x8xf32> to vector<8x8xf32>
    %113 = arith.mulf %111, %112 : vector<8x8xf32>
    %114 = arith.addf %108, %113 : vector<8x8xf32>
    %115 = vector.extract_strided_slice %88 {offsets = [0, 4], sizes = [8, 1], strides = [1, 1]} : vector<8x8xf32> to vector<8x1xf32>
    %116 = vector.extract_strided_slice %90 {offsets = [4, 0], sizes = [1, 8], strides = [1, 1]} : vector<8x8xf32> to vector<1x8xf32>
    %117 = vector.broadcast %115 : vector<8x1xf32> to vector<8x8xf32>
    %118 = vector.broadcast %116 : vector<1x8xf32> to vector<8x8xf32>
    %119 = arith.mulf %117, %118 : vector<8x8xf32>
    %120 = arith.addf %114, %119 : vector<8x8xf32>
    %121 = vector.extract_strided_slice %88 {offsets = [0, 5], sizes = [8, 1], strides = [1, 1]} : vector<8x8xf32> to vector<8x1xf32>
    %122 = vector.extract_strided_slice %90 {offsets = [5, 0], sizes = [1, 8], strides = [1, 1]} : vector<8x8xf32> to vector<1x8xf32>
    %123 = vector.broadcast %121 : vector<8x1xf32> to vector<8x8xf32>
    %124 = vector.broadcast %122 : vector<1x8xf32> to vector<8x8xf32>
    %125 = arith.mulf %123, %124 : vector<8x8xf32>
    %126 = arith.addf %120, %125 : vector<8x8xf32>
    %127 = vector.extract_strided_slice %88 {offsets = [0, 6], sizes = [8, 1], strides = [1, 1]} : vector<8x8xf32> to vector<8x1xf32>
    %128 = vector.extract_strided_slice %90 {offsets = [6, 0], sizes = [1, 8], strides = [1, 1]} : vector<8x8xf32> to vector<1x8xf32>
    %129 = vector.broadcast %127 : vector<8x1xf32> to vector<8x8xf32>
    %130 = vector.broadcast %128 : vector<1x8xf32> to vector<8x8xf32>
    %131 = arith.mulf %129, %130 : vector<8x8xf32>
    %132 = arith.addf %126, %131 : vector<8x8xf32>
    %133 = vector.extract_strided_slice %88 {offsets = [0, 7], sizes = [8, 1], strides = [1, 1]} : vector<8x8xf32> to vector<8x1xf32>
    %134 = vector.extract_strided_slice %90 {offsets = [7, 0], sizes = [1, 8], strides = [1, 1]} : vector<8x8xf32> to vector<1x8xf32>
    %135 = vector.broadcast %133 : vector<8x1xf32> to vector<8x8xf32>
    %136 = vector.broadcast %134 : vector<1x8xf32> to vector<8x8xf32>
    %137 = arith.mulf %135, %136 : vector<8x8xf32>
    %138 = arith.addf %132, %137 : vector<8x8xf32>
    %139 = vector.broadcast %91 : vector<1x8xf32> to vector<8x8xf32>
    %140 = arith.addf %138, %139 : vector<8x8xf32>
    %cst_17 = arith.constant 0.000000e+00 : f32
    %141 = vector.broadcast %cst_17 : f32 to vector<8x8xf32>
    %142 = arith.maximumf %140, %141 : vector<8x8xf32>
    %143 = vector.extract_strided_slice %9 {offsets = [2, 0, 0], sizes = [1, 8, 8], strides = [1, 1, 1]} : vector<4x8x8xf32> to vector<1x8x8xf32>
    %144 = vector.shape_cast %143 : vector<1x8x8xf32> to vector<8x8xf32>
    %145 = vector.extract_strided_slice %10 {offsets = [3, 0], sizes = [1, 8], strides = [1, 1]} : vector<6x8xf32> to vector<1x8xf32>
    %146 = vector.extract_strided_slice %142 {offsets = [0, 0], sizes = [8, 1], strides = [1, 1]} : vector<8x8xf32> to vector<8x1xf32>
    %147 = vector.extract_strided_slice %144 {offsets = [0, 0], sizes = [1, 8], strides = [1, 1]} : vector<8x8xf32> to vector<1x8xf32>
    %148 = vector.broadcast %146 : vector<8x1xf32> to vector<8x8xf32>
    %149 = vector.broadcast %147 : vector<1x8xf32> to vector<8x8xf32>
    %150 = arith.mulf %148, %149 : vector<8x8xf32>
    %151 = vector.extract_strided_slice %142 {offsets = [0, 1], sizes = [8, 1], strides = [1, 1]} : vector<8x8xf32> to vector<8x1xf32>
    %152 = vector.extract_strided_slice %144 {offsets = [1, 0], sizes = [1, 8], strides = [1, 1]} : vector<8x8xf32> to vector<1x8xf32>
    %153 = vector.broadcast %151 : vector<8x1xf32> to vector<8x8xf32>
    %154 = vector.broadcast %152 : vector<1x8xf32> to vector<8x8xf32>
    %155 = arith.mulf %153, %154 : vector<8x8xf32>
    %156 = arith.addf %150, %155 : vector<8x8xf32>
    %157 = vector.extract_strided_slice %142 {offsets = [0, 2], sizes = [8, 1], strides = [1, 1]} : vector<8x8xf32> to vector<8x1xf32>
    %158 = vector.extract_strided_slice %144 {offsets = [2, 0], sizes = [1, 8], strides = [1, 1]} : vector<8x8xf32> to vector<1x8xf32>
    %159 = vector.broadcast %157 : vector<8x1xf32> to vector<8x8xf32>
    %160 = vector.broadcast %158 : vector<1x8xf32> to vector<8x8xf32>
    %161 = arith.mulf %159, %160 : vector<8x8xf32>
    %162 = arith.addf %156, %161 : vector<8x8xf32>
    %163 = vector.extract_strided_slice %142 {offsets = [0, 3], sizes = [8, 1], strides = [1, 1]} : vector<8x8xf32> to vector<8x1xf32>
    %164 = vector.extract_strided_slice %144 {offsets = [3, 0], sizes = [1, 8], strides = [1, 1]} : vector<8x8xf32> to vector<1x8xf32>
    %165 = vector.broadcast %163 : vector<8x1xf32> to vector<8x8xf32>
    %166 = vector.broadcast %164 : vector<1x8xf32> to vector<8x8xf32>
    %167 = arith.mulf %165, %166 : vector<8x8xf32>
    %168 = arith.addf %162, %167 : vector<8x8xf32>
    %169 = vector.extract_strided_slice %142 {offsets = [0, 4], sizes = [8, 1], strides = [1, 1]} : vector<8x8xf32> to vector<8x1xf32>
    %170 = vector.extract_strided_slice %144 {offsets = [4, 0], sizes = [1, 8], strides = [1, 1]} : vector<8x8xf32> to vector<1x8xf32>
    %171 = vector.broadcast %169 : vector<8x1xf32> to vector<8x8xf32>
    %172 = vector.broadcast %170 : vector<1x8xf32> to vector<8x8xf32>
    %173 = arith.mulf %171, %172 : vector<8x8xf32>
    %174 = arith.addf %168, %173 : vector<8x8xf32>
    %175 = vector.extract_strided_slice %142 {offsets = [0, 5], sizes = [8, 1], strides = [1, 1]} : vector<8x8xf32> to vector<8x1xf32>
    %176 = vector.extract_strided_slice %144 {offsets = [5, 0], sizes = [1, 8], strides = [1, 1]} : vector<8x8xf32> to vector<1x8xf32>
    %177 = vector.broadcast %175 : vector<8x1xf32> to vector<8x8xf32>
    %178 = vector.broadcast %176 : vector<1x8xf32> to vector<8x8xf32>
    %179 = arith.mulf %177, %178 : vector<8x8xf32>
    %180 = arith.addf %174, %179 : vector<8x8xf32>
    %181 = vector.extract_strided_slice %142 {offsets = [0, 6], sizes = [8, 1], strides = [1, 1]} : vector<8x8xf32> to vector<8x1xf32>
    %182 = vector.extract_strided_slice %144 {offsets = [6, 0], sizes = [1, 8], strides = [1, 1]} : vector<8x8xf32> to vector<1x8xf32>
    %183 = vector.broadcast %181 : vector<8x1xf32> to vector<8x8xf32>
    %184 = vector.broadcast %182 : vector<1x8xf32> to vector<8x8xf32>
    %185 = arith.mulf %183, %184 : vector<8x8xf32>
    %186 = arith.addf %180, %185 : vector<8x8xf32>
    %187 = vector.extract_strided_slice %142 {offsets = [0, 7], sizes = [8, 1], strides = [1, 1]} : vector<8x8xf32> to vector<8x1xf32>
    %188 = vector.extract_strided_slice %144 {offsets = [7, 0], sizes = [1, 8], strides = [1, 1]} : vector<8x8xf32> to vector<1x8xf32>
    %189 = vector.broadcast %187 : vector<8x1xf32> to vector<8x8xf32>
    %190 = vector.broadcast %188 : vector<1x8xf32> to vector<8x8xf32>
    %191 = arith.mulf %189, %190 : vector<8x8xf32>
    %192 = arith.addf %186, %191 : vector<8x8xf32>
    %193 = vector.broadcast %145 : vector<1x8xf32> to vector<8x8xf32>
    %194 = arith.addf %192, %193 : vector<8x8xf32>
    %195 = vector.extract_strided_slice %12 {offsets = [2, 0], sizes = [1, 4], strides = [1, 1]} : vector<3x4xf32> to vector<1x4xf32>
    %196 = vector.extract_strided_slice %194 {offsets = [0, 0], sizes = [8, 1], strides = [1, 1]} : vector<8x8xf32> to vector<8x1xf32>
    %197 = vector.extract_strided_slice %11 {offsets = [0, 0], sizes = [1, 4], strides = [1, 1]} : vector<8x4xf32> to vector<1x4xf32>
    %198 = vector.broadcast %196 : vector<8x1xf32> to vector<8x4xf32>
    %199 = vector.broadcast %197 : vector<1x4xf32> to vector<8x4xf32>
    %200 = arith.mulf %198, %199 : vector<8x4xf32>
    %201 = vector.extract_strided_slice %194 {offsets = [0, 1], sizes = [8, 1], strides = [1, 1]} : vector<8x8xf32> to vector<8x1xf32>
    %202 = vector.extract_strided_slice %11 {offsets = [1, 0], sizes = [1, 4], strides = [1, 1]} : vector<8x4xf32> to vector<1x4xf32>
    %203 = vector.broadcast %201 : vector<8x1xf32> to vector<8x4xf32>
    %204 = vector.broadcast %202 : vector<1x4xf32> to vector<8x4xf32>
    %205 = arith.mulf %203, %204 : vector<8x4xf32>
    %206 = arith.addf %200, %205 : vector<8x4xf32>
    %207 = vector.extract_strided_slice %194 {offsets = [0, 2], sizes = [8, 1], strides = [1, 1]} : vector<8x8xf32> to vector<8x1xf32>
    %208 = vector.extract_strided_slice %11 {offsets = [2, 0], sizes = [1, 4], strides = [1, 1]} : vector<8x4xf32> to vector<1x4xf32>
    %209 = vector.broadcast %207 : vector<8x1xf32> to vector<8x4xf32>
    %210 = vector.broadcast %208 : vector<1x4xf32> to vector<8x4xf32>
    %211 = arith.mulf %209, %210 : vector<8x4xf32>
    %212 = arith.addf %206, %211 : vector<8x4xf32>
    %213 = vector.extract_strided_slice %194 {offsets = [0, 3], sizes = [8, 1], strides = [1, 1]} : vector<8x8xf32> to vector<8x1xf32>
    %214 = vector.extract_strided_slice %11 {offsets = [3, 0], sizes = [1, 4], strides = [1, 1]} : vector<8x4xf32> to vector<1x4xf32>
    %215 = vector.broadcast %213 : vector<8x1xf32> to vector<8x4xf32>
    %216 = vector.broadcast %214 : vector<1x4xf32> to vector<8x4xf32>
    %217 = arith.mulf %215, %216 : vector<8x4xf32>
    %218 = arith.addf %212, %217 : vector<8x4xf32>
    %219 = vector.extract_strided_slice %194 {offsets = [0, 4], sizes = [8, 1], strides = [1, 1]} : vector<8x8xf32> to vector<8x1xf32>
    %220 = vector.extract_strided_slice %11 {offsets = [4, 0], sizes = [1, 4], strides = [1, 1]} : vector<8x4xf32> to vector<1x4xf32>
    %221 = vector.broadcast %219 : vector<8x1xf32> to vector<8x4xf32>
    %222 = vector.broadcast %220 : vector<1x4xf32> to vector<8x4xf32>
    %223 = arith.mulf %221, %222 : vector<8x4xf32>
    %224 = arith.addf %218, %223 : vector<8x4xf32>
    %225 = vector.extract_strided_slice %194 {offsets = [0, 5], sizes = [8, 1], strides = [1, 1]} : vector<8x8xf32> to vector<8x1xf32>
    %226 = vector.extract_strided_slice %11 {offsets = [5, 0], sizes = [1, 4], strides = [1, 1]} : vector<8x4xf32> to vector<1x4xf32>
    %227 = vector.broadcast %225 : vector<8x1xf32> to vector<8x4xf32>
    %228 = vector.broadcast %226 : vector<1x4xf32> to vector<8x4xf32>
    %229 = arith.mulf %227, %228 : vector<8x4xf32>
    %230 = arith.addf %224, %229 : vector<8x4xf32>
    %231 = vector.extract_strided_slice %194 {offsets = [0, 6], sizes = [8, 1], strides = [1, 1]} : vector<8x8xf32> to vector<8x1xf32>
    %232 = vector.extract_strided_slice %11 {offsets = [6, 0], sizes = [1, 4], strides = [1, 1]} : vector<8x4xf32> to vector<1x4xf32>
    %233 = vector.broadcast %231 : vector<8x1xf32> to vector<8x4xf32>
    %234 = vector.broadcast %232 : vector<1x4xf32> to vector<8x4xf32>
    %235 = arith.mulf %233, %234 : vector<8x4xf32>
    %236 = arith.addf %230, %235 : vector<8x4xf32>
    %237 = vector.extract_strided_slice %194 {offsets = [0, 7], sizes = [8, 1], strides = [1, 1]} : vector<8x8xf32> to vector<8x1xf32>
    %238 = vector.extract_strided_slice %11 {offsets = [7, 0], sizes = [1, 4], strides = [1, 1]} : vector<8x4xf32> to vector<1x4xf32>
    %239 = vector.broadcast %237 : vector<8x1xf32> to vector<8x4xf32>
    %240 = vector.broadcast %238 : vector<1x4xf32> to vector<8x4xf32>
    %241 = arith.mulf %239, %240 : vector<8x4xf32>
    %242 = arith.addf %236, %241 : vector<8x4xf32>
    %243 = vector.broadcast %195 : vector<1x4xf32> to vector<8x4xf32>
    %244 = arith.addf %242, %243 : vector<8x4xf32>
    %245 = vector.extract_strided_slice %12 {offsets = [0, 0], sizes = [1, 4], strides = [1, 1]} : vector<3x4xf32> to vector<1x4xf32>
    %246 = vector.shape_cast %245 : vector<1x4xf32> to vector<1x1x4xf32>
    %247 = vector.broadcast %4 : vector<4x8x1xf32> to vector<4x8x4xf32>
    %248 = vector.broadcast %246 : vector<1x1x4xf32> to vector<4x8x4xf32>
    %249 = arith.mulf %247, %248 : vector<4x8x4xf32>
    %250 = vector.extract_strided_slice %12 {offsets = [1, 0], sizes = [1, 4], strides = [1, 1]} : vector<3x4xf32> to vector<1x4xf32>
    %251 = vector.shape_cast %250 : vector<1x4xf32> to vector<1x1x4xf32>
    %252 = vector.broadcast %7 : vector<4x8x1xf32> to vector<4x8x4xf32>
    %253 = vector.broadcast %251 : vector<1x1x4xf32> to vector<4x8x4xf32>
    %254 = arith.mulf %252, %253 : vector<4x8x4xf32>
    %255 = arith.addf %249, %254 : vector<4x8x4xf32>
    %256 = vector.shape_cast %244 : vector<8x4xf32> to vector<1x8x4xf32>
    %257 = vector.broadcast %256 : vector<1x8x4xf32> to vector<4x8x4xf32>
    %258 = arith.addf %255, %257 : vector<4x8x4xf32>
    %cst_18 = arith.constant dense<0xFF800000> : vector<8x4xf32>
    %259 = vector.multi_reduction <maximumf>, %258, %cst_18 [0] : vector<4x8x4xf32> to vector<8x4xf32>
    %260 = vector.shape_cast %259 : vector<8x4xf32> to vector<1x8x4xf32>
    %261 = vector.broadcast %260 : vector<1x8x4xf32> to vector<4x8x4xf32>
    %262 = arith.subf %258, %261 : vector<4x8x4xf32>
    %263 = math.exp %262 : vector<4x8x4xf32>
    %cst_19 = arith.constant dense<0.000000e+00> : vector<8x4xf32>
    %264 = vector.multi_reduction <add>, %263, %cst_19 [0] : vector<4x8x4xf32> to vector<8x4xf32>
    %265 = tpu.reciprocal %264 {approx = true} : vector<8x4xf32> -> vector<8x4xf32>
    %266 = vector.extract_strided_slice %8 {offsets = [1, 0, 0], sizes = [1, 2, 8], strides = [1, 1, 1]} : vector<2x2x8xf32> to vector<1x2x8xf32>
    %267 = vector.shape_cast %266 : vector<1x2x8xf32> to vector<2x8xf32>
    %268 = vector.extract_strided_slice %267 {offsets = [0, 0], sizes = [1, 8], strides = [1, 1]} : vector<2x8xf32> to vector<1x8xf32>
    %269 = vector.shape_cast %268 : vector<1x8xf32> to vector<1x1x8xf32>
    %270 = vector.broadcast %4 : vector<4x8x1xf32> to vector<4x8x8xf32>
    %271 = vector.broadcast %269 : vector<1x1x8xf32> to vector<4x8x8xf32>
    %272 = arith.mulf %270, %271 : vector<4x8x8xf32>
    %273 = vector.extract_strided_slice %267 {offsets = [1, 0], sizes = [1, 8], strides = [1, 1]} : vector<2x8xf32> to vector<1x8xf32>
    %274 = vector.shape_cast %273 : vector<1x8xf32> to vector<1x1x8xf32>
    %275 = vector.broadcast %7 : vector<4x8x1xf32> to vector<4x8x8xf32>
    %276 = vector.broadcast %274 : vector<1x1x8xf32> to vector<4x8x8xf32>
    %277 = arith.mulf %275, %276 : vector<4x8x8xf32>
    %278 = arith.addf %272, %277 : vector<4x8x8xf32>
    %279 = vector.extract_strided_slice %10 {offsets = [4, 0], sizes = [1, 8], strides = [1, 1]} : vector<6x8xf32> to vector<1x8xf32>
    %280 = vector.shape_cast %279 : vector<1x8xf32> to vector<1x1x8xf32>
    %281 = vector.broadcast %280 : vector<1x1x8xf32> to vector<4x8x8xf32>
    %282 = arith.addf %278, %281 : vector<4x8x8xf32>
    %cst_20 = arith.constant 0.000000e+00 : f32
    %283 = vector.broadcast %cst_20 : f32 to vector<4x8x8xf32>
    %284 = arith.maximumf %282, %283 : vector<4x8x8xf32>
    %285 = vector.shape_cast %284 : vector<4x8x8xf32> to vector<32x8xf32>
    %286 = vector.extract_strided_slice %9 {offsets = [3, 0, 0], sizes = [1, 8, 8], strides = [1, 1, 1]} : vector<4x8x8xf32> to vector<1x8x8xf32>
    %287 = vector.shape_cast %286 : vector<1x8x8xf32> to vector<8x8xf32>
    %288 = vector.extract_strided_slice %10 {offsets = [5, 0], sizes = [1, 8], strides = [1, 1]} : vector<6x8xf32> to vector<1x8xf32>
    %289 = vector.extract_strided_slice %285 {offsets = [0, 0], sizes = [32, 1], strides = [1, 1]} : vector<32x8xf32> to vector<32x1xf32>
    %290 = vector.extract_strided_slice %287 {offsets = [0, 0], sizes = [1, 8], strides = [1, 1]} : vector<8x8xf32> to vector<1x8xf32>
    %291 = vector.broadcast %289 : vector<32x1xf32> to vector<32x8xf32>
    %292 = vector.broadcast %290 : vector<1x8xf32> to vector<32x8xf32>
    %293 = arith.mulf %291, %292 : vector<32x8xf32>
    %294 = vector.extract_strided_slice %285 {offsets = [0, 1], sizes = [32, 1], strides = [1, 1]} : vector<32x8xf32> to vector<32x1xf32>
    %295 = vector.extract_strided_slice %287 {offsets = [1, 0], sizes = [1, 8], strides = [1, 1]} : vector<8x8xf32> to vector<1x8xf32>
    %296 = vector.broadcast %294 : vector<32x1xf32> to vector<32x8xf32>
    %297 = vector.broadcast %295 : vector<1x8xf32> to vector<32x8xf32>
    %298 = arith.mulf %296, %297 : vector<32x8xf32>
    %299 = arith.addf %293, %298 : vector<32x8xf32>
    %300 = vector.extract_strided_slice %285 {offsets = [0, 2], sizes = [32, 1], strides = [1, 1]} : vector<32x8xf32> to vector<32x1xf32>
    %301 = vector.extract_strided_slice %287 {offsets = [2, 0], sizes = [1, 8], strides = [1, 1]} : vector<8x8xf32> to vector<1x8xf32>
    %302 = vector.broadcast %300 : vector<32x1xf32> to vector<32x8xf32>
    %303 = vector.broadcast %301 : vector<1x8xf32> to vector<32x8xf32>
    %304 = arith.mulf %302, %303 : vector<32x8xf32>
    %305 = arith.addf %299, %304 : vector<32x8xf32>
    %306 = vector.extract_strided_slice %285 {offsets = [0, 3], sizes = [32, 1], strides = [1, 1]} : vector<32x8xf32> to vector<32x1xf32>
    %307 = vector.extract_strided_slice %287 {offsets = [3, 0], sizes = [1, 8], strides = [1, 1]} : vector<8x8xf32> to vector<1x8xf32>
    %308 = vector.broadcast %306 : vector<32x1xf32> to vector<32x8xf32>
    %309 = vector.broadcast %307 : vector<1x8xf32> to vector<32x8xf32>
    %310 = arith.mulf %308, %309 : vector<32x8xf32>
    %311 = arith.addf %305, %310 : vector<32x8xf32>
    %312 = vector.extract_strided_slice %285 {offsets = [0, 4], sizes = [32, 1], strides = [1, 1]} : vector<32x8xf32> to vector<32x1xf32>
    %313 = vector.extract_strided_slice %287 {offsets = [4, 0], sizes = [1, 8], strides = [1, 1]} : vector<8x8xf32> to vector<1x8xf32>
    %314 = vector.broadcast %312 : vector<32x1xf32> to vector<32x8xf32>
    %315 = vector.broadcast %313 : vector<1x8xf32> to vector<32x8xf32>
    %316 = arith.mulf %314, %315 : vector<32x8xf32>
    %317 = arith.addf %311, %316 : vector<32x8xf32>
    %318 = vector.extract_strided_slice %285 {offsets = [0, 5], sizes = [32, 1], strides = [1, 1]} : vector<32x8xf32> to vector<32x1xf32>
    %319 = vector.extract_strided_slice %287 {offsets = [5, 0], sizes = [1, 8], strides = [1, 1]} : vector<8x8xf32> to vector<1x8xf32>
    %320 = vector.broadcast %318 : vector<32x1xf32> to vector<32x8xf32>
    %321 = vector.broadcast %319 : vector<1x8xf32> to vector<32x8xf32>
    %322 = arith.mulf %320, %321 : vector<32x8xf32>
    %323 = arith.addf %317, %322 : vector<32x8xf32>
    %324 = vector.extract_strided_slice %285 {offsets = [0, 6], sizes = [32, 1], strides = [1, 1]} : vector<32x8xf32> to vector<32x1xf32>
    %325 = vector.extract_strided_slice %287 {offsets = [6, 0], sizes = [1, 8], strides = [1, 1]} : vector<8x8xf32> to vector<1x8xf32>
    %326 = vector.broadcast %324 : vector<32x1xf32> to vector<32x8xf32>
    %327 = vector.broadcast %325 : vector<1x8xf32> to vector<32x8xf32>
    %328 = arith.mulf %326, %327 : vector<32x8xf32>
    %329 = arith.addf %323, %328 : vector<32x8xf32>
    %330 = vector.extract_strided_slice %285 {offsets = [0, 7], sizes = [32, 1], strides = [1, 1]} : vector<32x8xf32> to vector<32x1xf32>
    %331 = vector.extract_strided_slice %287 {offsets = [7, 0], sizes = [1, 8], strides = [1, 1]} : vector<8x8xf32> to vector<1x8xf32>
    %332 = vector.broadcast %330 : vector<32x1xf32> to vector<32x8xf32>
    %333 = vector.broadcast %331 : vector<1x8xf32> to vector<32x8xf32>
    %334 = arith.mulf %332, %333 : vector<32x8xf32>
    %335 = arith.addf %329, %334 : vector<32x8xf32>
    %336 = vector.broadcast %288 : vector<1x8xf32> to vector<32x8xf32>
    %337 = arith.addf %335, %336 : vector<32x8xf32>
    %338 = vector.shape_cast %337 : vector<32x8xf32> to vector<4x8x8xf32>
    %339 = vector.extract_strided_slice %263 {offsets = [0, 0, 0], sizes = [4, 8, 1], strides = [1, 1, 1]} : vector<4x8x4xf32> to vector<4x8x1xf32>
    %340 = vector.broadcast %339 : vector<4x8x1xf32> to vector<4x8x8xf32>
    %341 = arith.mulf %340, %338 : vector<4x8x8xf32>
    %cst_21 = arith.constant dense<0.000000e+00> : vector<8x8xf32>
    %342 = vector.multi_reduction <add>, %341, %cst_21 [0] : vector<4x8x8xf32> to vector<8x8xf32>
    %343 = vector.extract_strided_slice %265 {offsets = [0, 0], sizes = [8, 1], strides = [1, 1]} : vector<8x4xf32> to vector<8x1xf32>
    %344 = vector.broadcast %343 : vector<8x1xf32> to vector<8x8xf32>
    %345 = arith.mulf %342, %344 : vector<8x8xf32>
    %346 = vector.extract_strided_slice %263 {offsets = [0, 0, 1], sizes = [4, 8, 1], strides = [1, 1, 1]} : vector<4x8x4xf32> to vector<4x8x1xf32>
    %347 = vector.broadcast %346 : vector<4x8x1xf32> to vector<4x8x8xf32>
    %348 = arith.mulf %347, %338 : vector<4x8x8xf32>
    %cst_22 = arith.constant dense<0.000000e+00> : vector<8x8xf32>
    %349 = vector.multi_reduction <add>, %348, %cst_22 [0] : vector<4x8x8xf32> to vector<8x8xf32>
    %350 = vector.extract_strided_slice %265 {offsets = [0, 1], sizes = [8, 1], strides = [1, 1]} : vector<8x4xf32> to vector<8x1xf32>
    %351 = vector.broadcast %350 : vector<8x1xf32> to vector<8x8xf32>
    %352 = arith.mulf %349, %351 : vector<8x8xf32>
    %353 = vector.extract_strided_slice %263 {offsets = [0, 0, 2], sizes = [4, 8, 1], strides = [1, 1, 1]} : vector<4x8x4xf32> to vector<4x8x1xf32>
    %354 = vector.broadcast %353 : vector<4x8x1xf32> to vector<4x8x8xf32>
    %355 = arith.mulf %354, %338 : vector<4x8x8xf32>
    %cst_23 = arith.constant dense<0.000000e+00> : vector<8x8xf32>
    %356 = vector.multi_reduction <add>, %355, %cst_23 [0] : vector<4x8x8xf32> to vector<8x8xf32>
    %357 = vector.extract_strided_slice %265 {offsets = [0, 2], sizes = [8, 1], strides = [1, 1]} : vector<8x4xf32> to vector<8x1xf32>
    %358 = vector.broadcast %357 : vector<8x1xf32> to vector<8x8xf32>
    %359 = arith.mulf %356, %358 : vector<8x8xf32>
    %360 = vector.extract_strided_slice %263 {offsets = [0, 0, 3], sizes = [4, 8, 1], strides = [1, 1, 1]} : vector<4x8x4xf32> to vector<4x8x1xf32>
    %361 = vector.broadcast %360 : vector<4x8x1xf32> to vector<4x8x8xf32>
    %362 = arith.mulf %361, %338 : vector<4x8x8xf32>
    %cst_24 = arith.constant dense<0.000000e+00> : vector<8x8xf32>
    %363 = vector.multi_reduction <add>, %362, %cst_24 [0] : vector<4x8x8xf32> to vector<8x8xf32>
    %364 = vector.extract_strided_slice %265 {offsets = [0, 3], sizes = [8, 1], strides = [1, 1]} : vector<8x4xf32> to vector<8x1xf32>
    %365 = vector.broadcast %364 : vector<8x1xf32> to vector<8x8xf32>
    %366 = arith.mulf %363, %365 : vector<8x8xf32>
    %367 = tpu.concatenate %345, %352, %359, %366 in 1 : vector<8x8xf32>, vector<8x8xf32>, vector<8x8xf32>, vector<8x8xf32> -> vector<8x32xf32>
    %368 = vector.shape_cast %367 : vector<8x32xf32> to vector<1x8x32xf32>
    %c0_25 = arith.constant 0 : index
    %c0_26 = arith.constant 0 : index
    %c0_27 = arith.constant 0 : index
    %369 = vector.load %arg7[%c0_25, %c0_26, %c0_27] : memref<1x8x32xf32, #tpu.memory_space<vmem>>, vector<1x8x32xf32>
    tpu.vector_store %arg7[%c0_25, %c0_26, %c0_27], %368 {strides = array<i32>} : memref<1x8x32xf32, #tpu.memory_space<vmem>>, vector<1x8x32xf32>,
    return
  }
  func.func @transform_0(%arg0: i32) -> (i32, i32, i32, i32) {
    %c0_i32 = arith.constant 0 : i32
    %c0_i32_0 = arith.constant 0 : i32
    %c0_i32_1 = arith.constant 0 : i32
    %c0_i32_2 = arith.constant 0 : i32
    return %arg0, %c0_i32, %c0_i32_0, %c0_i32_1 : i32, i32, i32, i32
  }
  func.func @transform_1(%arg0: i32) -> (i32, i32, i32) {
    %c0_i32 = arith.constant 0 : i32
    %c0_i32_0 = arith.constant 0 : i32
    %c0_i32_1 = arith.constant 0 : i32
    %c0_i32_2 = arith.constant 0 : i32
    return %c0_i32, %c0_i32_0, %c0_i32_1 : i32, i32, i32
  }
  func.func @transform_2(%arg0: i32) -> (i32, i32, i32) {
    %c0_i32 = arith.constant 0 : i32
    %c0_i32_0 = arith.constant 0 : i32
    %c0_i32_1 = arith.constant 0 : i32
    %c0_i32_2 = arith.constant 0 : i32
    return %c0_i32, %c0_i32_0, %c0_i32_1 : i32, i32, i32
  }
  func.func @transform_3(%arg0: i32) -> (i32, i32) {
    %c0_i32 = arith.constant 0 : i32
    %c0_i32_0 = arith.constant 0 : i32
    %c0_i32_1 = arith.constant 0 : i32
    return %c0_i32, %c0_i32_0 : i32, i32
  }
  func.func @transform_4(%arg0: i32) -> (i32, i32) {
    %c0_i32 = arith.constant 0 : i32
    %c0_i32_0 = arith.constant 0 : i32
    %c0_i32_1 = arith.constant 0 : i32
    return %c0_i32, %c0_i32_0 : i32, i32
  }
  func.func @transform_5(%arg0: i32) -> (i32, i32) {
    %c0_i32 = arith.constant 0 : i32
    %c0_i32_0 = arith.constant 0 : i32
    %c0_i32_1 = arith.constant 0 : i32
    return %c0_i32, %c0_i32_0 : i32, i32
  }
  func.func @transform_6(%arg0: i32) -> (i32, i32, i32) {
    %c0_i32 = arith.constant 0 : i32
    %c0_i32_0 = arith.constant 0 : i32
    %c0_i32_1 = arith.constant 0 : i32
    return %arg0, %c0_i32, %c0_i32_0 : i32, i32, i32
  }
}

</mosaic_0001>

<llo_original>
// kernel: tpu_custom_call.1
$region0: #{tpu_custom_call.1}
  #allocation0 [shape = 'u32[]', space=smem, size = 0x4, offset = 0x4, fixed_abs, tag = 'smem constant byte address 0x4 - core index']
  #allocation1 [shape = 'u32[144,128]{1,0:T(1,128)}', space=vmem, size = 0x12000, scoped, tag = 'internal scratch']
  %s0 = inlined_call_operand.hbm [shape: f32[2,2,4,8], index: 0, kind: input, shape index: {}]
  %s1 = inlined_call_operand.vmem [shape: f32[2,2,8], index: 1, kind: input, shape index: {}]
  %s2 = inlined_call_operand.hbm [shape: f32[4,8,8], index: 2, kind: input, shape index: {}]
  %s3 = inlined_call_operand.vmem [shape: f32[6,8], index: 3, kind: input, shape index: {}]
  %s4 = inlined_call_operand.vmem [shape: f32[8,4], index: 4, kind: input, shape index: {}]
  %s5 = inlined_call_operand.vmem [shape: f32[3,4], index: 5, kind: input, shape index: {}]
  %s6 = inlined_call_operand.hbm [shape: f32[2,8,32], index: 6, kind: output, shape index: {}]
  %s7 = sld [smem:[#allocation0]]
  $region65: #{tpu_custom_call.1} parent=0
    _
  %s9 = ssub.s32 1, %s7
  %s10 = scalar_select 0, %s9, %s7
  $region1: #{tpu_custom_call.1} parent=0
    #allocation2 [shape = 'u8[8192]{0}', space=vmem, size = 0x2000, scoped, tag = 'input window, operand 0']
    #allocation3 [shape = 's32[2]{0}', space=sflag, size = 0x8, scoped, tag = 'scoped memory for tpu_custom_call.1']
    #allocation4 [shape = 's32[2]{0}', space=sflag, size = 0x8, scoped, tag = 'scoped memory for tpu_custom_call.1']
    #allocation5 [shape = 'u8[16384]{0}', space=vmem, size = 0x4000, scoped, tag = 'input window, operand 2, single buffered']
    #allocation6 [shape = 's32[1]{0}', space=sflag, size = 0x4, scoped, tag = 'scoped memory for tpu_custom_call.1']
    #allocation7 [shape = 'u8[8192]{0}', space=vmem, size = 0x2000, scoped, tag = 'output window, operand 0']
    %11 = vsyncpa [#allocation3], 0
    %s12 = scalar_lea.sflag [#allocation3], 1
    %13 = vsyncpa %s12, 0
    %14 = vsyncpa [#allocation6], 0
    %15 = vsyncpa [#allocation4], 0
    %s16 = scalar_lea.sflag [#allocation4], 1
    %17 = vsyncpa %s16, 0
    loop: start=0, step=1, limit=4
    $region2: #{tpu_custom_call.1} parent=1 // loop_pre_header
      _
    $region3: #{tpu_custom_call.1} parent=1 // loop_header
      %s19 = sphi 0, %s23
      %p20 = scmp.ge.s32.totalorder %s19, 4
      %s29 = sphi 0, %s31
      %s32 = sphi 0, %s29
      %s33 = sphi 0, %s32
      %s49 = sphi 0, %s33
      %s53 = sphi 0, %s53
      %s55 = sphi 0, %s53
      %s56 = sphi 0, %s55
      %s70 = sphi 0, %s56
      %s74 = sphi 0, %s74
      %s76 = sphi 0, %s74
      %s77 = sphi 0, %s76
      %s91 = sphi 0, %s77
      %s95 = sphi 0, %s95
      %s97 = sphi 0, %s95
      %s98 = sphi 0, %s97
      %s112 = sphi 0, %s98
      %s116 = sphi 0, %s116
      %s118 = sphi 0, %s116
      %s119 = sphi 0, %s118
      %s133 = sphi 0, %s119
      %s137 = sphi 0, %s137
      %s139 = sphi 0, %s137
      %s140 = sphi 0, %s139
      %s154 = sphi 0, %s140
      %s160 = sphi 0, %s162
      %s163 = sphi 0, %s160
      %s164 = sphi 0, %s163
      %s180 = sphi 0, %s164
    $region4: #{tpu_custom_call.1} parent=1 // loop_header_branch
      %22 = sbr.rel (%p20) target = $region8
    $region5: #{tpu_custom_call.1} parent=1 // loop_body
      %s24 = ssub.s32 %s19, 1
      %s25 = ssub.s32 %s19, 2
      %s26 = sadd.s32 %s19, 1
      %s27 = ssub.s32 %s19, %s26
      %p28 = scmp.eq.s32.totalorder %s27, 0
      %s30 = sadd.s32 %s29, 1
      %s31 = scalar_select %p28, %s29, %s30
      %p34 = pneg %p28
      %p35 = scmp.eq.s32.totalorder %s19, 1
      %p36 = por %p34, %p35
      %p37 = scmp.ne.s32.totalorder %s29, %s32
      %p38 = scmp.eq.s32.totalorder %s19, 0
      %p39 = por %p37, %p38
      %p40 = scmp.ne.s32.totalorder %s29, %s32
      %p41 = scmp.eq.s32.totalorder %s24, 1
      %p42 = por %p40, %p41
      %p43 = scmp.ne.s32.totalorder %s32, %s33
      %p44 = scmp.eq.s32.totalorder %s24, 0
      %p45 = por %p43, %p44
      %p46 = scmp.ne.s32.totalorder %s32, %s33
      %p47 = scmp.eq.s32.totalorder %s25, 1
      %p48 = por %p46, %p47
      %p50 = scmp.ne.s32.totalorder %s33, %s49
      %p51 = scmp.eq.s32.totalorder %s25, 0
      %p52 = por %p50, %p51
      %s54 = sadd.s32 %s53, 1
      %p57 = scmp.eq.s32.totalorder %s19, 1
      %p58 = scmp.ne.s32.totalorder %s53, %s55
      %p59 = scmp.eq.s32.totalorder %s19, 0
      %p60 = por %p58, %p59
      %p61 = scmp.ne.s32.totalorder %s53, %s55
      %p62 = scmp.eq.s32.totalorder %s24, 1
      %p63 = por %p61, %p62
      %p64 = scmp.ne.s32.totalorder %s55, %s56
      %p65 = scmp.eq.s32.totalorder %s24, 0
      %p66 = por %p64, %p65
      %p67 = scmp.ne.s32.totalorder %s55, %s56
      %p68 = scmp.eq.s32.totalorder %s25, 1
      %p69 = por %p67, %p68
      %p71 = scmp.ne.s32.totalorder %s56, %s70
      %p72 = scmp.eq.s32.totalorder %s25, 0
      %p73 = por %p71, %p72
      %s75 = sadd.s32 %s74, 1
      %p78 = scmp.eq.s32.totalorder %s19, 1
      %p79 = scmp.ne.s32.totalorder %s74, %s76
      %p80 = scmp.eq.s32.totalorder %s19, 0
      %p81 = por %p79, %p80
      %p82 = scmp.ne.s32.totalorder %s74, %s76
      %p83 = scmp.eq.s32.totalorder %s24, 1
      %p84 = por %p82, %p83
      %p85 = scmp.ne.s32.totalorder %s76, %s77
      %p86 = scmp.eq.s32.totalorder %s24, 0
      %p87 = por %p85, %p86
      %p88 = scmp.ne.s32.totalorder %s76, %s77
      %p89 = scmp.eq.s32.totalorder %s25, 1
      %p90 = por %p88, %p89
      %p92 = scmp.ne.s32.totalorder %s77, %s91
      %p93 = scmp.eq.s32.totalorder %s25, 0
      %p94 = por %p92, %p93
      %s96 = sadd.s32 %s95, 1
      %p99 = scmp.eq.s32.totalorder %s19, 1
      %p100 = scmp.ne.s32.totalorder %s95, %s97
      %p101 = scmp.eq.s32.totalorder %s19, 0
      %p102 = por %p100, %p101
      %p103 = scmp.ne.s32.totalorder %s95, %s97
      %p104 = scmp.eq.s32.totalorder %s24, 1
      %p105 = por %p103, %p104
      %p106 = scmp.ne.s32.totalorder %s97, %s98
      %p107 = scmp.eq.s32.totalorder %s24, 0
      %p108 = por %p106, %p107
      %p109 = scmp.ne.s32.totalorder %s97, %s98
      %p110 = scmp.eq.s32.totalorder %s25, 1
      %p111 = por %p109, %p110
      %p113 = scmp.ne.s32.totalorder %s98, %s112
      %p114 = scmp.eq.s32.totalorder %s25, 0
      %p115 = por %p113, %p114
      %s117 = sadd.s32 %s116, 1
      %p120 = scmp.eq.s32.totalorder %s19, 1
      %p121 = scmp.ne.s32.totalorder %s116, %s118
      %p122 = scmp.eq.s32.totalorder %s19, 0
      %p123 = por %p121, %p122
      %p124 = scmp.ne.s32.totalorder %s116, %s118
      %p125 = scmp.eq.s32.totalorder %s24, 1
      %p126 = por %p124, %p125
      %p127 = scmp.ne.s32.totalorder %s118, %s119
      %p128 = scmp.eq.s32.totalorder %s24, 0
      %p129 = por %p127, %p128
      %p130 = scmp.ne.s32.totalorder %s118, %s119
      %p131 = scmp.eq.s32.totalorder %s25, 1
      %p132 = por %p130, %p131
      %p134 = scmp.ne.s32.totalorder %s119, %s133
      %p135 = scmp.eq.s32.totalorder %s25, 0
      %p136 = por %p134, %p135
      %s138 = sadd.s32 %s137, 1
      %p141 = scmp.eq.s32.totalorder %s19, 1
      %p142 = scmp.ne.s32.totalorder %s137, %s139
      %p143 = scmp.eq.s32.totalorder %s19, 0
      %p144 = por %p142, %p143
      %p145 = scmp.ne.s32.totalorder %s137, %s139
      %p146 = scmp.eq.s32.totalorder %s24, 1
      %p147 = por %p145, %p146
      %p148 = scmp.ne.s32.totalorder %s139, %s140
      %p149 = scmp.eq.s32.totalorder %s24, 0
      %p150 = por %p148, %p149
      %p151 = scmp.ne.s32.totalorder %s139, %s140
      %p152 = scmp.eq.s32.totalorder %s25, 1
      %p153 = por %p151, %p152
      %p155 = scmp.ne.s32.totalorder %s140, %s154
      %p156 = scmp.eq.s32.totalorder %s25, 0
      %p157 = por %p155, %p156
      %s158 = ssub.s32 %s19, %s26
      %p159 = scmp.eq.s32.totalorder %s158, 0
      %s161 = sadd.s32 %s160, 1
      %s162 = scalar_select %p159, %s160, %s161
      %p165 = pneg %p159
      %p166 = scmp.eq.s32.totalorder %s19, 1
      %p167 = por %p165, %p166
      %p168 = scmp.ne.s32.totalorder %s160, %s163
      %p169 = scmp.eq.s32.totalorder %s19, 0
      %p170 = por %p168, %p169
      %p171 = scmp.ne.s32.totalorder %s160, %s163
      %p172 = scmp.eq.s32.totalorder %s24, 1
      %p173 = por %p171, %p172
      %p174 = scmp.ne.s32.totalorder %s163, %s164
      %p175 = scmp.eq.s32.totalorder %s24, 0
      %p176 = por %p174, %p175
      %p177 = scmp.ne.s32.totalorder %s163, %s164
      %p178 = scmp.eq.s32.totalorder %s25, 1
      %p179 = por %p177, %p178
      %p181 = scmp.ne.s32.totalorder %s164, %s180
      %p182 = scmp.eq.s32.totalorder %s25, 0
      %p183 = por %p181, %p182
      %p184 = scmp.le.s32.totalorder 1, %s19
      %p185 = scmp.lt.s32.totalorder %s19, 3
      %p186 = pnand %p184, %p185
      %p187 = pneg %p186
      // Predicated region
      $region9: #{tpu_custom_call.1} parent=5 // pred_check
        _
      $region10: #{tpu_custom_call.1} parent=5 // pred_check_branch
        %189 = sbr.rel (%p186) target = $region12
      $region11: #{tpu_custom_call.1} parent=5 // pred_region
        %s190 = ssub.s32 %s19, 1
        // Predicated region
        $region13: #{tpu_custom_call.1} parent=11 // pred_check
          %p191 = pneg %p66
        $region14: #{tpu_custom_call.1} parent=11 // pred_check_branch
          %193 = sbr.rel (%p191) target = $region16
        $region15: #{tpu_custom_call.1} parent=11 // pred_region
          _
        $region16: #{tpu_custom_call.1} parent=11 // pred_fallthru
          _
        // Predicated region
        $region17: #{tpu_custom_call.1} parent=11 // pred_check
          %p194 = pneg %p87
        $region18: #{tpu_custom_call.1} parent=11 // pred_check_branch
          %196 = sbr.rel (%p194) target = $region20
        $region19: #{tpu_custom_call.1} parent=11 // pred_region
          %s198 = ssub.s32 512, 512
          %199 = vsyncadd [#allocation6], %s198
          %s200 = sshll.u32 [#allocation5], 4
          %s201 = int_to_ptr.vmem [resolvable:$true] %s200
          %206 = dma.hbm_to_vmem [thread:$0]  %s2, 512, %s201, [#allocation6], 128, 128, 8
        $region20: #{tpu_custom_call.1} parent=11 // pred_fallthru
          _
        // Predicated region
        $region21: #{tpu_custom_call.1} parent=11 // pred_check
          %p207 = pneg %p108
        $region22: #{tpu_custom_call.1} parent=11 // pred_check_branch
          %209 = sbr.rel (%p207) target = $region24
        $region23: #{tpu_custom_call.1} parent=11 // pred_region
          _
        $region24: #{tpu_custom_call.1} parent=11 // pred_fallthru
          _
        // Predicated region
        $region25: #{tpu_custom_call.1} parent=11 // pred_check
          %p210 = pneg %p129
        $region26: #{tpu_custom_call.1} parent=11 // pred_check_branch
          %212 = sbr.rel (%p210) target = $region28
        $region27: #{tpu_custom_call.1} parent=11 // pred_region
          _
        $region28: #{tpu_custom_call.1} parent=11 // pred_fallthru
          _
        // Predicated region
        $region29: #{tpu_custom_call.1} parent=11 // pred_check
          %p213 = pneg %p150
        $region30: #{tpu_custom_call.1} parent=11 // pred_check_branch
          %215 = sbr.rel (%p213) target = $region32
        $region31: #{tpu_custom_call.1} parent=11 // pred_region
          _
        $region32: #{tpu_custom_call.1} parent=11 // pred_fallthru
          _
      $region12: #{tpu_custom_call.1} parent=5 // pred_fallthru
        _
      %p216 = scmp.lt.s32.totalorder %s19, 2
      // Predicated region
      $region33: #{tpu_custom_call.1} parent=5 // pred_check
        %p217 = pneg %p216
      $region34: #{tpu_custom_call.1} parent=5 // pred_check_branch
        %219 = sbr.rel (%p217) target = $region36
      $region35: #{tpu_custom_call.1} parent=5 // pred_region
        // Predicated region
        $region37: #{tpu_custom_call.1} parent=35 // pred_check
          %p220 = pneg %p39
        $region38: #{tpu_custom_call.1} parent=35 // pred_check_branch
          %222 = sbr.rel (%p220) target = $region40
        $region39: #{tpu_custom_call.1} parent=35 // pred_region
          %s223 = sand.u32 %s29, 1
          %s224 = scalar_lea.sflag [#allocation3], %s223
          %s225 = sand.u32 %s29, 1
          %s226 = smul.addr %s225, 8
          %s227 = scalar_lea.vmem [#allocation2], %s226
          %s229 = ssub.s32 128, 128
          %230 = vsyncadd %s224, %s229
          %s231 = smul.addr %s19, 2
          %s232 = smul.addr %s231, 64
          %s233 = scalar_lea.hbm %s0, %s232
          %s234 = sshll.u32 %s227, 4
          %s235 = int_to_ptr.vmem [resolvable:$true] %s234
          %240 = dma.hbm_to_vmem [thread:$0]  %s233, 128, %s235, %s224, 64, 64, 4
        $region40: #{tpu_custom_call.1} parent=35 // pred_fallthru
          _
      $region36: #{tpu_custom_call.1} parent=5 // pred_fallthru
        _
      %p241 = scmp.le.s32.totalorder 1, %s19
      %p242 = scmp.lt.s32.totalorder %s19, 3
      %p243 = pnand %p241, %p242
      %p244 = pneg %p243
      // Predicated region
      $region41: #{tpu_custom_call.1} parent=5 // pred_check
        _
      $region42: #{tpu_custom_call.1} parent=5 // pred_check_branch
        %246 = sbr.rel (%p243) target = $region44
      $region43: #{tpu_custom_call.1} parent=5 // pred_region
        %s247 = ssub.s32 %s19, 1
        %s248 = sand.u32 %s32, 1
        %s249 = scalar_lea.sflag [#allocation3], %s248
        %s250 = sand.u32 %s32, 1
        %s251 = smul.addr %s250, 8
        %s252 = scalar_lea.vmem [#allocation2], %s251
        // Predicated region
        $region45: #{tpu_custom_call.1} parent=43 // pred_check
          %p253 = pneg %p45
        $region46: #{tpu_custom_call.1} parent=43 // pred_check_branch
          %255 = sbr.rel (%p253) target = $region48
        $region47: #{tpu_custom_call.1} parent=43 // pred_region
          %256 = dma.done %s249, 128
        $region48: #{tpu_custom_call.1} parent=43 // pred_fallthru
          _
        // Predicated region
        $region49: #{tpu_custom_call.1} parent=43 // pred_check
          %p257 = pneg %p87
        $region50: #{tpu_custom_call.1} parent=43 // pred_check_branch
          %259 = sbr.rel (%p257) target = $region52
        $region51: #{tpu_custom_call.1} parent=43 // pred_region
          %260 = dma.done [#allocation6], 512
        $region52: #{tpu_custom_call.1} parent=43 // pred_fallthru
          _
        %s261 = sand.u32 %s32, 1
        %s262 = scalar_lea.sflag [#allocation3], %s261
        %s263 = sand.u32 %s32, 1
        %s264 = smul.addr %s263, 8
        %s265 = scalar_lea.vmem [#allocation2], %s264
        %p266 = pneg %p45
        %p267 = pneg %p42
        %p268 = pneg %p66
        %p269 = pneg %p63
        %p270 = pneg %p87
        %p271 = pneg %p84
        %p272 = pneg %p108
        %p273 = pneg %p105
        %p274 = pneg %p129
        %p275 = pneg %p126
        %p276 = pneg %p150
        %p277 = pneg %p147
        %p278 = pneg %p176
        %p279 = pneg %p173
        %s280 = sand.u32 %s163, 1
        %s281 = scalar_lea.sflag [#allocation4], %s280
        %s282 = sand.u32 %s163, 1
        %s283 = smul.addr %s282, 8
        %s284 = scalar_lea.vmem [#allocation7], %s283
        %v285 = vld [vmem:[%s252] sm:$0xf]
        %v286 = vld [vmem:[%s252 + $0x4] sm:$0xf]
        %v287 = vlaneseq
        %v288 = vshrl.u32 %v287, 7
        %v289 = vsub.s32 0, %v288
        %v290 = vrot.slane %v285, %v289
        %292 = vbcast.lane.b32.xlu0 %v290, 256
        %v293 = vpop.permute.xlu0 %292
        %v294 = vlaneseq
        %v295 = vshrl.u32 %v294, 7
        %v296 = vsub.s32 1, %v295
        %v297 = vrot.slane %v285, %v296
        %299 = vbcast.lane.b32.xlu0 %v297, 256
        %v300 = vpop.permute.xlu0 %299
        %v301 = vlaneseq
        %v302 = vshrl.u32 %v301, 7
        %v303 = vsub.s32 2, %v302
        %v304 = vrot.slane %v285, %v303
        %306 = vbcast.lane.b32.xlu0 %v304, 256
        %v307 = vpop.permute.xlu0 %306
        %v308 = vlaneseq
        %v309 = vshrl.u32 %v308, 7
        %v310 = vsub.s32 3, %v309
        %v311 = vrot.slane %v285, %v310
        %313 = vbcast.lane.b32.xlu0 %v311, 256
        %v314 = vpop.permute.xlu0 %313
        %v315 = vlaneseq
        %v316 = vshrl.u32 %v315, 7
        %v317 = vsub.s32 0, %v316
        %v318 = vrot.slane %v286, %v317
        %320 = vbcast.lane.b32.xlu0 %v318, 256
        %v321 = vpop.permute.xlu0 %320
        %v322 = vlaneseq
        %v323 = vshrl.u32 %v322, 7
        %v324 = vsub.s32 1, %v323
        %v325 = vrot.slane %v286, %v324
        %327 = vbcast.lane.b32.xlu0 %v325, 256
        %v328 = vpop.permute.xlu0 %327
        %v329 = vlaneseq
        %v330 = vshrl.u32 %v329, 7
        %v331 = vsub.s32 2, %v330
        %v332 = vrot.slane %v286, %v331
        %334 = vbcast.lane.b32.xlu0 %v332, 256
        %v335 = vpop.permute.xlu0 %334
        %v336 = vlaneseq
        %v337 = vshrl.u32 %v336, 7
        %v338 = vsub.s32 3, %v337
        %v339 = vrot.slane %v286, %v338
        %341 = vbcast.lane.b32.xlu0 %v339, 256
        %v342 = vpop.permute.xlu0 %341
        %v343 = vld [vmem:[%s1] sm:$0x3]
        %v344 = vld [vmem:[%s1 + $0x2] sm:$0x3]
        %v345 = vld [vmem:[#allocation5] sm:$0xff]
        %v346 = vld [vmem:[#allocation5 + $0x8] sm:$0xff]
        %v347 = vld [vmem:[#allocation5 + $0x10] sm:$0xff]
        %v348 = vld [vmem:[#allocation5 + $0x18] sm:$0xff]
        %v349 = vld [vmem:[%s3] sm:$0x3f]
        %v350 = vld [vmem:[%s4] sm:$0xff]
        %v351 = vld [vmem:[%s5] sm:$0x7]
        %v352 = vlaneseq
        %v353 = vshrl.u32 %v352, 7
        %v354 = vsub.s32 0, %v353
        %v355 = vrot.slane %v343, %v354
        %v356 = vmul.f32 %v293, %v355
        %v357 = vmul.f32 %v300, %v355
        %v358 = vmul.f32 %v307, %v355
        %v359 = vmul.f32 %v314, %v355
        %v360 = vlaneseq
        %v361 = vshrl.u32 %v360, 7
        %v362 = vsub.s32 1, %v361
        %v363 = vrot.slane %v343, %v362
        %v364 = vmul.f32 %v321, %v363
        %v365 = vmul.f32 %v328, %v363
        %v366 = vmul.f32 %v335, %v363
        %v367 = vmul.f32 %v342, %v363
        %v368 = vadd.f32 %v356, %v364
        %v369 = vadd.f32 %v357, %v365
        %v370 = vadd.f32 %v358, %v366
        %v371 = vadd.f32 %v359, %v367
        %v372 = vlaneseq
        %v373 = vshrl.u32 %v372, 7
        %v374 = vsub.s32 0, %v373
        %v375 = vrot.slane %v349, %v374
        %v376 = vadd.f32 %v368, %v375
        %v377 = vadd.f32 %v369, %v375
        %v378 = vadd.f32 %v370, %v375
        %v379 = vadd.f32 %v371, %v375
        %v380 = vmax.f32 %v376, 0.0
        %v381 = vmax.f32 %v377, 0.0
        %v382 = vmax.f32 %v378, 0.0
        %v383 = vmax.f32 %v379, 0.0
        %385 = vset.pattern.permute.xlu0 0
        %386 = vperm.xlu0 %385, %v380
        %v387 = vpop.permute.xlu0 %386
        %390 = vset.pattern.permute.xlu0 0
        %391 = vperm.xlu0 %390, %v381
        %v392 = vpop.permute.xlu0 %391
        %395 = vset.pattern.permute.xlu0 0
        %396 = vperm.xlu0 %395, %v382
        %v397 = vpop.permute.xlu0 %396
        %400 = vset.pattern.permute.xlu0 0
        %401 = vperm.xlu0 %400, %v383
        %v402 = vpop.permute.xlu0 %401
        %v404 = vlaneseq
        %v405 = vshrl.u32 %v404, 7
        %v406 = vsub.s32 0, %v405
        %v407 = vrot.slane %v345, %v406
        %v408 = vmul.f32 %v387, %v407
        %v409 = vmul.f32 %v392, %v407
        %v410 = vmul.f32 %v397, %v407
        %v411 = vmul.f32 %v402, %v407
        %412 = vset.pattern.permute.xlu0 1
        %413 = vperm.xlu0 %412, %v380
        %v414 = vpop.permute.xlu0 %413
        %416 = vset.pattern.permute.xlu0 1
        %417 = vperm.xlu0 %416, %v381
        %v418 = vpop.permute.xlu0 %417
        %420 = vset.pattern.permute.xlu0 1
        %421 = vperm.xlu0 %420, %v382
        %v422 = vpop.permute.xlu0 %421
        %424 = vset.pattern.permute.xlu0 1
        %425 = vperm.xlu0 %424, %v383
        %v426 = vpop.permute.xlu0 %425
        %v428 = vlaneseq
        %v429 = vshrl.u32 %v428, 7
        %v430 = vsub.s32 1, %v429
        %v431 = vrot.slane %v345, %v430
        %v432 = vmul.f32 %v414, %v431
        %v433 = vmul.f32 %v418, %v431
        %v434 = vmul.f32 %v422, %v431
        %v435 = vmul.f32 %v426, %v431
        %v436 = vadd.f32 %v408, %v432
        %v437 = vadd.f32 %v409, %v433
        %v438 = vadd.f32 %v410, %v434
        %v439 = vadd.f32 %v411, %v435
        %440 = vset.pattern.permute.xlu0 2
        %441 = vperm.xlu0 %440, %v380
        %v442 = vpop.permute.xlu0 %441
        %444 = vset.pattern.permute.xlu0 2
        %445 = vperm.xlu0 %444, %v381
        %v446 = vpop.permute.xlu0 %445
        %448 = vset.pattern.permute.xlu0 2
        %449 = vperm.xlu0 %448, %v382
        %v450 = vpop.permute.xlu0 %449
        %452 = vset.pattern.permute.xlu0 2
        %453 = vperm.xlu0 %452, %v383
        %v454 = vpop.permute.xlu0 %453
        %v456 = vlaneseq
        %v457 = vshrl.u32 %v456, 7
        %v458 = vsub.s32 2, %v457
        %v459 = vrot.slane %v345, %v458
        %v460 = vmul.f32 %v442, %v459
        %v461 = vmul.f32 %v446, %v459
        %v462 = vmul.f32 %v450, %v459
        %v463 = vmul.f32 %v454, %v459
        %v464 = vadd.f32 %v436, %v460
        %v465 = vadd.f32 %v437, %v461
        %v466 = vadd.f32 %v438, %v462
        %v467 = vadd.f32 %v439, %v463
        %468 = vset.pattern.permute.xlu0 3
        %469 = vperm.xlu0 %468, %v380
        %v470 = vpop.permute.xlu0 %469
        %472 = vset.pattern.permute.xlu0 3
        %473 = vperm.xlu0 %472, %v381
        %v474 = vpop.permute.xlu0 %473
        %476 = vset.pattern.permute.xlu0 3
        %477 = vperm.xlu0 %476, %v382
        %v478 = vpop.permute.xlu0 %477
        %480 = vset.pattern.permute.xlu0 3
        %481 = vperm.xlu0 %480, %v383
        %v482 = vpop.permute.xlu0 %481
        %v484 = vlaneseq
        %v485 = vshrl.u32 %v484, 7
        %v486 = vsub.s32 3, %v485
        %v487 = vrot.slane %v345, %v486
        %v488 = vmul.f32 %v470, %v487
        %v489 = vmul.f32 %v474, %v487
        %v490 = vmul.f32 %v478, %v487
        %v491 = vmul.f32 %v482, %v487
        %v492 = vadd.f32 %v464, %v488
        %v493 = vadd.f32 %v465, %v489
        %v494 = vadd.f32 %v466, %v490
        %v495 = vadd.f32 %v467, %v491
        %496 = vset.pattern.permute.xlu0 4
        %497 = vperm.xlu0 %496, %v380
        %v498 = vpop.permute.xlu0 %497
        %500 = vset.pattern.permute.xlu0 4
        %501 = vperm.xlu0 %500, %v381
        %v502 = vpop.permute.xlu0 %501
        %504 = vset.pattern.permute.xlu0 4
        %505 = vperm.xlu0 %504, %v382
        %v506 = vpop.permute.xlu0 %505
        %508 = vset.pattern.permute.xlu0 4
        %509 = vperm.xlu0 %508, %v383
        %v510 = vpop.permute.xlu0 %509
        %v512 = vlaneseq
        %v513 = vshrl.u32 %v512, 7
        %v514 = vsub.s32 4, %v513
        %v515 = vrot.slane %v345, %v514
        %v516 = vmul.f32 %v498, %v515
        %v517 = vmul.f32 %v502, %v515
        %v518 = vmul.f32 %v506, %v515
        %v519 = vmul.f32 %v510, %v515
        %v520 = vadd.f32 %v492, %v516
        %v521 = vadd.f32 %v493, %v517
        %v522 = vadd.f32 %v494, %v518
        %v523 = vadd.f32 %v495, %v519
        %524 = vset.pattern.permute.xlu0 5
        %525 = vperm.xlu0 %524, %v380
        %v526 = vpop.permute.xlu0 %525
        %528 = vset.pattern.permute.xlu0 5
        %529 = vperm.xlu0 %528, %v381
        %v530 = vpop.permute.xlu0 %529
        %532 = vset.pattern.permute.xlu0 5
        %533 = vperm.xlu0 %532, %v382
        %v534 = vpop.permute.xlu0 %533
        %536 = vset.pattern.permute.xlu0 5
        %537 = vperm.xlu0 %536, %v383
        %v538 = vpop.permute.xlu0 %537
        %v540 = vlaneseq
        %v541 = vshrl.u32 %v540, 7
        %v542 = vsub.s32 5, %v541
        %v543 = vrot.slane %v345, %v542
        %v544 = vmul.f32 %v526, %v543
        %v545 = vmul.f32 %v530, %v543
        %v546 = vmul.f32 %v534, %v543
        %v547 = vmul.f32 %v538, %v543
        %v548 = vadd.f32 %v520, %v544
        %v549 = vadd.f32 %v521, %v545
        %v550 = vadd.f32 %v522, %v546
        %v551 = vadd.f32 %v523, %v547
        %552 = vset.pattern.permute.xlu0 6
        %553 = vperm.xlu0 %552, %v380
        %v554 = vpop.permute.xlu0 %553
        %556 = vset.pattern.permute.xlu0 6
        %557 = vperm.xlu0 %556, %v381
        %v558 = vpop.permute.xlu0 %557
        %560 = vset.pattern.permute.xlu0 6
        %561 = vperm.xlu0 %560, %v382
        %v562 = vpop.permute.xlu0 %561
        %564 = vset.pattern.permute.xlu0 6
        %565 = vperm.xlu0 %564, %v383
        %v566 = vpop.permute.xlu0 %565
        %v568 = vlaneseq
        %v569 = vshrl.u32 %v568, 7
        %v570 = vsub.s32 6, %v569
        %v571 = vrot.slane %v345, %v570
        %v572 = vmul.f32 %v554, %v571
        %v573 = vmul.f32 %v558, %v571
        %v574 = vmul.f32 %v562, %v571
        %v575 = vmul.f32 %v566, %v571
        %v576 = vadd.f32 %v548, %v572
        %v577 = vadd.f32 %v549, %v573
        %v578 = vadd.f32 %v550, %v574
        %v579 = vadd.f32 %v551, %v575
        %580 = vset.pattern.permute.xlu0 7
        %581 = vperm.xlu0 %580, %v380
        %v582 = vpop.permute.xlu0 %581
        %584 = vset.pattern.permute.xlu0 7
        %585 = vperm.xlu0 %584, %v381
        %v586 = vpop.permute.xlu0 %585
        %588 = vset.pattern.permute.xlu0 7
        %589 = vperm.xlu0 %588, %v382
        %v590 = vpop.permute.xlu0 %589
        %592 = vset.pattern.permute.xlu0 7
        %593 = vperm.xlu0 %592, %v383
        %v594 = vpop.permute.xlu0 %593
        %v596 = vlaneseq
        %v597 = vshrl.u32 %v596, 7
        %v598 = vsub.s32 7, %v597
        %v599 = vrot.slane %v345, %v598
        %v600 = vmul.f32 %v582, %v599
        %v601 = vmul.f32 %v586, %v599
        %v602 = vmul.f32 %v590, %v599
        %v603 = vmul.f32 %v594, %v599
        %v604 = vadd.f32 %v576, %v600
        %v605 = vadd.f32 %v577, %v601
        %v606 = vadd.f32 %v578, %v602
        %v607 = vadd.f32 %v579, %v603
        %v608 = vlaneseq
        %v609 = vshrl.u32 %v608, 7
        %v610 = vsub.s32 1, %v609
        %v611 = vrot.slane %v349, %v610
        %v612 = vadd.f32 %v604, %v611
        %v613 = vadd.f32 %v605, %v611
        %v614 = vadd.f32 %v606, %v611
        %v615 = vadd.f32 %v607, %v611
        %vm616 = vcmask 64512
        %v617 = vsel %vm616, %v612, 0.0
        %v618 = vsel %vm616, %v613, 0.0
        %v619 = vadd.f32 %v617, %v618
        %v620 = vsel %vm616, %v614, 0.0
        %v621 = vadd.f32 %v619, %v620
        %v622 = vsel %vm616, %v615, 0.0
        %v623 = vadd.f32 %v621, %v622
        %v624 = vmul.f32 %v623, 0.25
        %626 = vset.pattern.permute.xlu0 0
        %627 = vperm.xlu0 %626, %v624
        %v628 = vpop.permute.xlu0 %627
        %v630 = vlaneseq
        %v631 = vshrl.u32 %v630, 7
        %v632 = vsub.s32 0, %v631
        %v633 = vrot.slane %v346, %v632
        %v634 = vmul.f32 %v628, %v633
        %635 = vset.pattern.permute.xlu0 1
        %636 = vperm.xlu0 %635, %v624
        %v637 = vpop.permute.xlu0 %636
        %v639 = vlaneseq
        %v640 = vshrl.u32 %v639, 7
        %v641 = vsub.s32 1, %v640
        %v642 = vrot.slane %v346, %v641
        %v643 = vmul.f32 %v637, %v642
        %v644 = vadd.f32 %v634, %v643
        %645 = vset.pattern.permute.xlu0 2
        %646 = vperm.xlu0 %645, %v624
        %v647 = vpop.permute.xlu0 %646
        %v649 = vlaneseq
        %v650 = vshrl.u32 %v649, 7
        %v651 = vsub.s32 2, %v650
        %v652 = vrot.slane %v346, %v651
        %v653 = vmul.f32 %v647, %v652
        %v654 = vadd.f32 %v644, %v653
        %655 = vset.pattern.permute.xlu0 3
        %656 = vperm.xlu0 %655, %v624
        %v657 = vpop.permute.xlu0 %656
        %v659 = vlaneseq
        %v660 = vshrl.u32 %v659, 7
        %v661 = vsub.s32 3, %v660
        %v662 = vrot.slane %v346, %v661
        %v663 = vmul.f32 %v657, %v662
        %v664 = vadd.f32 %v654, %v663
        %665 = vset.pattern.permute.xlu0 4
        %666 = vperm.xlu0 %665, %v624
        %v667 = vpop.permute.xlu0 %666
        %v669 = vlaneseq
        %v670 = vshrl.u32 %v669, 7
        %v671 = vsub.s32 4, %v670
        %v672 = vrot.slane %v346, %v671
        %v673 = vmul.f32 %v667, %v672
        %v674 = vadd.f32 %v664, %v673
        %675 = vset.pattern.permute.xlu0 5
        %676 = vperm.xlu0 %675, %v624
        %v677 = vpop.permute.xlu0 %676
        %v679 = vlaneseq
        %v680 = vshrl.u32 %v679, 7
        %v681 = vsub.s32 5, %v680
        %v682 = vrot.slane %v346, %v681
        %v683 = vmul.f32 %v677, %v682
        %v684 = vadd.f32 %v674, %v683
        %685 = vset.pattern.permute.xlu0 6
        %686 = vperm.xlu0 %685, %v624
        %v687 = vpop.permute.xlu0 %686
        %v689 = vlaneseq
        %v690 = vshrl.u32 %v689, 7
        %v691 = vsub.s32 6, %v690
        %v692 = vrot.slane %v346, %v691
        %v693 = vmul.f32 %v687, %v692
        %v694 = vadd.f32 %v684, %v693
        %695 = vset.pattern.permute.xlu0 7
        %696 = vperm.xlu0 %695, %v624
        %v697 = vpop.permute.xlu0 %696
        %v699 = vlaneseq
        %v700 = vshrl.u32 %v699, 7
        %v701 = vsub.s32 7, %v700
        %v702 = vrot.slane %v346, %v701
        %v703 = vmul.f32 %v697, %v702
        %v704 = vadd.f32 %v694, %v703
        %v705 = vlaneseq
        %v706 = vshrl.u32 %v705, 7
        %v707 = vsub.s32 2, %v706
        %v708 = vrot.slane %v349, %v707
        %v709 = vadd.f32 %v704, %v708
        %v710 = vmax.f32 %v709, 0.0
        %712 = vset.pattern.permute.xlu0 0
        %713 = vperm.xlu0 %712, %v710
        %v714 = vpop.permute.xlu0 %713
        %v716 = vlaneseq
        %v717 = vshrl.u32 %v716, 7
        %v718 = vsub.s32 0, %v717
        %v719 = vrot.slane %v347, %v718
        %v720 = vmul.f32 %v714, %v719
        %721 = vset.pattern.permute.xlu0 1
        %722 = vperm.xlu0 %721, %v710
        %v723 = vpop.permute.xlu0 %722
        %v725 = vlaneseq
        %v726 = vshrl.u32 %v725, 7
        %v727 = vsub.s32 1, %v726
        %v728 = vrot.slane %v347, %v727
        %v729 = vmul.f32 %v723, %v728
        %v730 = vadd.f32 %v720, %v729
        %731 = vset.pattern.permute.xlu0 2
        %732 = vperm.xlu0 %731, %v710
        %v733 = vpop.permute.xlu0 %732
        %v735 = vlaneseq
        %v736 = vshrl.u32 %v735, 7
        %v737 = vsub.s32 2, %v736
        %v738 = vrot.slane %v347, %v737
        %v739 = vmul.f32 %v733, %v738
        %v740 = vadd.f32 %v730, %v739
        %741 = vset.pattern.permute.xlu0 3
        %742 = vperm.xlu0 %741, %v710
        %v743 = vpop.permute.xlu0 %742
        %v745 = vlaneseq
        %v746 = vshrl.u32 %v745, 7
        %v747 = vsub.s32 3, %v746
        %v748 = vrot.slane %v347, %v747
        %v749 = vmul.f32 %v743, %v748
        %v750 = vadd.f32 %v740, %v749
        %751 = vset.pattern.permute.xlu0 4
        %752 = vperm.xlu0 %751, %v710
        %v753 = vpop.permute.xlu0 %752
        %v755 = vlaneseq
        %v756 = vshrl.u32 %v755, 7
        %v757 = vsub.s32 4, %v756
        %v758 = vrot.slane %v347, %v757
        %v759 = vmul.f32 %v753, %v758
        %v760 = vadd.f32 %v750, %v759
        %761 = vset.pattern.permute.xlu0 5
        %762 = vperm.xlu0 %761, %v710
        %v763 = vpop.permute.xlu0 %762
        %v765 = vlaneseq
        %v766 = vshrl.u32 %v765, 7
        %v767 = vsub.s32 5, %v766
        %v768 = vrot.slane %v347, %v767
        %v769 = vmul.f32 %v763, %v768
        %v770 = vadd.f32 %v760, %v769
        %771 = vset.pattern.permute.xlu0 6
        %772 = vperm.xlu0 %771, %v710
        %v773 = vpop.permute.xlu0 %772
        %v775 = vlaneseq
        %v776 = vshrl.u32 %v775, 7
        %v777 = vsub.s32 6, %v776
        %v778 = vrot.slane %v347, %v777
        %v779 = vmul.f32 %v773, %v778
        %v780 = vadd.f32 %v770, %v779
        %781 = vset.pattern.permute.xlu0 7
        %782 = vperm.xlu0 %781, %v710
        %v783 = vpop.permute.xlu0 %782
        %v785 = vlaneseq
        %v786 = vshrl.u32 %v785, 7
        %v787 = vsub.s32 7, %v786
        %v788 = vrot.slane %v347, %v787
        %v789 = vmul.f32 %v783, %v788
        %v790 = vadd.f32 %v780, %v789
        %v791 = vlaneseq
        %v792 = vshrl.u32 %v791, 7
        %v793 = vsub.s32 3, %v792
        %v794 = vrot.slane %v349, %v793
        %v795 = vadd.f32 %v790, %v794
        %797 = vset.pattern.permute.xlu0 0
        %798 = vperm.xlu0 %797, %v795
        %v799 = vpop.permute.xlu0 %798
        %v801 = vlaneseq
        %v802 = vshrl.u32 %v801, 7
        %v803 = vsub.s32 0, %v802
        %v804 = vrot.slane %v350, %v803
        %v805 = vmul.f32 %v799, %v804
        %806 = vset.pattern.permute.xlu0 1
        %807 = vperm.xlu0 %806, %v795
        %v808 = vpop.permute.xlu0 %807
        %v810 = vlaneseq
        %v811 = vshrl.u32 %v810, 7
        %v812 = vsub.s32 1, %v811
        %v813 = vrot.slane %v350, %v812
        %v814 = vmul.f32 %v808, %v813
        %v815 = vadd.f32 %v805, %v814
        %816 = vset.pattern.permute.xlu0 2
        %817 = vperm.xlu0 %816, %v795
        %v818 = vpop.permute.xlu0 %817
        %v820 = vlaneseq
        %v821 = vshrl.u32 %v820, 7
        %v822 = vsub.s32 2, %v821
        %v823 = vrot.slane %v350, %v822
        %v824 = vmul.f32 %v818, %v823
        %v825 = vadd.f32 %v815, %v824
        %826 = vset.pattern.permute.xlu0 3
        %827 = vperm.xlu0 %826, %v795
        %v828 = vpop.permute.xlu0 %827
        %v830 = vlaneseq
        %v831 = vshrl.u32 %v830, 7
        %v832 = vsub.s32 3, %v831
        %v833 = vrot.slane %v350, %v832
        %v834 = vmul.f32 %v828, %v833
        %v835 = vadd.f32 %v825, %v834
        %836 = vset.pattern.permute.xlu0 4
        %837 = vperm.xlu0 %836, %v795
        %v838 = vpop.permute.xlu0 %837
        %v840 = vlaneseq
        %v841 = vshrl.u32 %v840, 7
        %v842 = vsub.s32 4, %v841
        %v843 = vrot.slane %v350, %v842
        %v844 = vmul.f32 %v838, %v843
        %v845 = vadd.f32 %v835, %v844
        %846 = vset.pattern.permute.xlu0 5
        %847 = vperm.xlu0 %846, %v795
        %v848 = vpop.permute.xlu0 %847
        %v850 = vlaneseq
        %v851 = vshrl.u32 %v850, 7
        %v852 = vsub.s32 5, %v851
        %v853 = vrot.slane %v350, %v852
        %v854 = vmul.f32 %v848, %v853
        %v855 = vadd.f32 %v845, %v854
        %856 = vset.pattern.permute.xlu0 6
        %857 = vperm.xlu0 %856, %v795
        %v858 = vpop.permute.xlu0 %857
        %v860 = vlaneseq
        %v861 = vshrl.u32 %v860, 7
        %v862 = vsub.s32 6, %v861
        %v863 = vrot.slane %v350, %v862
        %v864 = vmul.f32 %v858, %v863
        %v865 = vadd.f32 %v855, %v864
        %866 = vset.pattern.permute.xlu0 7
        %867 = vperm.xlu0 %866, %v795
        %v868 = vpop.permute.xlu0 %867
        %v870 = vlaneseq
        %v871 = vshrl.u32 %v870, 7
        %v872 = vsub.s32 7, %v871
        %v873 = vrot.slane %v350, %v872
        %v874 = vmul.f32 %v868, %v873
        %v875 = vadd.f32 %v865, %v874
        %v876 = vlaneseq
        %v877 = vshrl.u32 %v876, 7
        %v878 = vsub.s32 2, %v877
        %v879 = vrot.slane %v351, %v878
        %v880 = vadd.f32 %v875, %v879
        %v881 = vlaneseq
        %v882 = vshrl.u32 %v881, 7
        %v883 = vsub.s32 0, %v882
        %v884 = vrot.slane %v351, %v883
        %v885 = vmul.f32 %v293, %v884
        %v886 = vmul.f32 %v300, %v884
        %v887 = vmul.f32 %v307, %v884
        %v888 = vmul.f32 %v314, %v884
        %v889 = vlaneseq
        %v890 = vshrl.u32 %v889, 7
        %v891 = vsub.s32 1, %v890
        %v892 = vrot.slane %v351, %v891
        %v893 = vmul.f32 %v321, %v892
        %v894 = vmul.f32 %v328, %v892
        %v895 = vmul.f32 %v335, %v892
        %v896 = vmul.f32 %v342, %v892
        %v897 = vadd.f32 %v885, %v893
        %v898 = vadd.f32 %v886, %v894
        %v899 = vadd.f32 %v887, %v895
        %v900 = vadd.f32 %v888, %v896
        %v901 = vadd.f32 %v897, %v880
        %v902 = vadd.f32 %v898, %v880
        %v903 = vadd.f32 %v899, %v880
        %v904 = vadd.f32 %v900, %v880
        %vm905 = vcmask 31744
        %v906 = vsel %vm905, %v901, -inf
        %v907 = vsel %vm905, %v902, -inf
        %v908 = vsel %vm905, %v903, -inf
        %v909 = vsel %vm905, %v904, -inf
        %v910 = vmax.f32 %v906, %v907
        %v911 = vmax.f32 %v908, %v909
        %v912 = vmax.f32 %v910, %v911
        %v913 = vsub.f32 %v901, %v912
        %v914 = vsub.f32 %v902, %v912
        %v915 = vsub.f32 %v903, %v912
        %v916 = vsub.f32 %v904, %v912
        %v917 = vmul.f32 %v913, 1.442695
        %v918 = vpow.pop %v917
        %v919 = vmul.f32 %v914, 1.442695
        %v920 = vpow.pop %v919
        %v921 = vmul.f32 %v915, 1.442695
        %v922 = vpow.pop %v921
        %v923 = vmul.f32 %v916, 1.442695
        %v924 = vpow.pop %v923
        %v925 = vsel %vm905, %v918, 0.0
        %v926 = vsel %vm905, %v920, 0.0
        %v927 = vadd.f32 %v925, %v926
        %v928 = vsel %vm905, %v922, 0.0
        %v929 = vadd.f32 %v927, %v928
        %v930 = vsel %vm905, %v924, 0.0
        %v931 = vadd.f32 %v929, %v930
        %v932 = vrcp.pop %v931
        %v933 = vlaneseq
        %v934 = vshrl.u32 %v933, 7
        %v935 = vsub.s32 0, %v934
        %v936 = vrot.slane %v344, %v935
        %v937 = vmul.f32 %v293, %v936
        %v938 = vmul.f32 %v300, %v936
        %v939 = vmul.f32 %v307, %v936
        %v940 = vmul.f32 %v314, %v936
        %v941 = vlaneseq
        %v942 = vshrl.u32 %v941, 7
        %v943 = vsub.s32 1, %v942
        %v944 = vrot.slane %v344, %v943
        %v945 = vmul.f32 %v321, %v944
        %v946 = vmul.f32 %v328, %v944
        %v947 = vmul.f32 %v335, %v944
        %v948 = vmul.f32 %v342, %v944
        %v949 = vadd.f32 %v937, %v945
        %v950 = vadd.f32 %v938, %v946
        %v951 = vadd.f32 %v939, %v947
        %v952 = vadd.f32 %v940, %v948
        %v953 = vlaneseq
        %v954 = vshrl.u32 %v953, 7
        %v955 = vsub.s32 4, %v954
        %v956 = vrot.slane %v349, %v955
        %v957 = vadd.f32 %v949, %v956
        %v958 = vadd.f32 %v950, %v956
        %v959 = vadd.f32 %v951, %v956
        %v960 = vadd.f32 %v952, %v956
        %v961 = vmax.f32 %v957, 0.0
        %v962 = vmax.f32 %v958, 0.0
        %v963 = vmax.f32 %v959, 0.0
        %v964 = vmax.f32 %v960, 0.0
        %966 = vset.pattern.permute.xlu0 0
        %967 = vperm.xlu0 %966, %v961
        %v968 = vpop.permute.xlu0 %967
        %971 = vset.pattern.permute.xlu0 0
        %972 = vperm.xlu0 %971, %v962
        %v973 = vpop.permute.xlu0 %972
        %976 = vset.pattern.permute.xlu0 0
        %977 = vperm.xlu0 %976, %v963
        %v978 = vpop.permute.xlu0 %977
        %981 = vset.pattern.permute.xlu0 0
        %982 = vperm.xlu0 %981, %v964
        %v983 = vpop.permute.xlu0 %982
        %v985 = vlaneseq
        %v986 = vshrl.u32 %v985, 7
        %v987 = vsub.s32 0, %v986
        %v988 = vrot.slane %v348, %v987
        %v989 = vmul.f32 %v968, %v988
        %v990 = vmul.f32 %v973, %v988
        %v991 = vmul.f32 %v978, %v988
        %v992 = vmul.f32 %v983, %v988
        %993 = vset.pattern.permute.xlu0 1
        %994 = vperm.xlu0 %993, %v961
        %v995 = vpop.permute.xlu0 %994
        %997 = vset.pattern.permute.xlu0 1
        %998 = vperm.xlu0 %997, %v962
        %v999 = vpop.permute.xlu0 %998
        %1001 = vset.pattern.permute.xlu0 1
        %1002 = vperm.xlu0 %1001, %v963
        %v1003 = vpop.permute.xlu0 %1002
        %1005 = vset.pattern.permute.xlu0 1
        %1006 = vperm.xlu0 %1005, %v964
        %v1007 = vpop.permute.xlu0 %1006
        %v1009 = vlaneseq
        %v1010 = vshrl.u32 %v1009, 7
        %v1011 = vsub.s32 1, %v1010
        %v1012 = vrot.slane %v348, %v1011
        %v1013 = vmul.f32 %v995, %v1012
        %v1014 = vmul.f32 %v999, %v1012
        %v1015 = vmul.f32 %v1003, %v1012
        %v1016 = vmul.f32 %v1007, %v1012
        %v1017 = vadd.f32 %v989, %v1013
        %v1018 = vadd.f32 %v990, %v1014
        %v1019 = vadd.f32 %v991, %v1015
        %v1020 = vadd.f32 %v992, %v1016
        %1021 = vset.pattern.permute.xlu0 2
        %1022 = vperm.xlu0 %1021, %v961
        %v1023 = vpop.permute.xlu0 %1022
        %1025 = vset.pattern.permute.xlu0 2
        %1026 = vperm.xlu0 %1025, %v962
        %v1027 = vpop.permute.xlu0 %1026
        %1029 = vset.pattern.permute.xlu0 2
        %1030 = vperm.xlu0 %1029, %v963
        %v1031 = vpop.permute.xlu0 %1030
        %1033 = vset.pattern.permute.xlu0 2
        %1034 = vperm.xlu0 %1033, %v964
        %v1035 = vpop.permute.xlu0 %1034
        %v1037 = vlaneseq
        %v1038 = vshrl.u32 %v1037, 7
        %v1039 = vsub.s32 2, %v1038
        %v1040 = vrot.slane %v348, %v1039
        %v1041 = vmul.f32 %v1023, %v1040
        %v1042 = vmul.f32 %v1027, %v1040
        %v1043 = vmul.f32 %v1031, %v1040
        %v1044 = vmul.f32 %v1035, %v1040
        %v1045 = vadd.f32 %v1017, %v1041
        %v1046 = vadd.f32 %v1018, %v1042
        %v1047 = vadd.f32 %v1019, %v1043
        %v1048 = vadd.f32 %v1020, %v1044
        %1049 = vset.pattern.permute.xlu0 3
        %1050 = vperm.xlu0 %1049, %v961
        %v1051 = vpop.permute.xlu0 %1050
        %1053 = vset.pattern.permute.xlu0 3
        %1054 = vperm.xlu0 %1053, %v962
        %v1055 = vpop.permute.xlu0 %1054
        %1057 = vset.pattern.permute.xlu0 3
        %1058 = vperm.xlu0 %1057, %v963
        %v1059 = vpop.permute.xlu0 %1058
        %1061 = vset.pattern.permute.xlu0 3
        %1062 = vperm.xlu0 %1061, %v964
        %v1063 = vpop.permute.xlu0 %1062
        %v1065 = vlaneseq
        %v1066 = vshrl.u32 %v1065, 7
        %v1067 = vsub.s32 3, %v1066
        %v1068 = vrot.slane %v348, %v1067
        %v1069 = vmul.f32 %v1051, %v1068
        %v1070 = vmul.f32 %v1055, %v1068
        %v1071 = vmul.f32 %v1059, %v1068
        %v1072 = vmul.f32 %v1063, %v1068
        %v1073 = vadd.f32 %v1045, %v1069
        %v1074 = vadd.f32 %v1046, %v1070
        %v1075 = vadd.f32 %v1047, %v1071
        %v1076 = vadd.f32 %v1048, %v1072
        %1077 = vset.pattern.permute.xlu0 4
        %1078 = vperm.xlu0 %1077, %v961
        %v1079 = vpop.permute.xlu0 %1078
        %1081 = vset.pattern.permute.xlu0 4
        %1082 = vperm.xlu0 %1081, %v962
        %v1083 = vpop.permute.xlu0 %1082
        %1085 = vset.pattern.permute.xlu0 4
        %1086 = vperm.xlu0 %1085, %v963
        %v1087 = vpop.permute.xlu0 %1086
        %1089 = vset.pattern.permute.xlu0 4
        %1090 = vperm.xlu0 %1089, %v964
        %v1091 = vpop.permute.xlu0 %1090
        %v1093 = vlaneseq
        %v1094 = vshrl.u32 %v1093, 7
        %v1095 = vsub.s32 4, %v1094
        %v1096 = vrot.slane %v348, %v1095
        %v1097 = vmul.f32 %v1079, %v1096
        %v1098 = vmul.f32 %v1083, %v1096
        %v1099 = vmul.f32 %v1087, %v1096
        %v1100 = vmul.f32 %v1091, %v1096
        %v1101 = vadd.f32 %v1073, %v1097
        %v1102 = vadd.f32 %v1074, %v1098
        %v1103 = vadd.f32 %v1075, %v1099
        %v1104 = vadd.f32 %v1076, %v1100
        %1105 = vset.pattern.permute.xlu0 5
        %1106 = vperm.xlu0 %1105, %v961
        %v1107 = vpop.permute.xlu0 %1106
        %1109 = vset.pattern.permute.xlu0 5
        %1110 = vperm.xlu0 %1109, %v962
        %v1111 = vpop.permute.xlu0 %1110
        %1113 = vset.pattern.permute.xlu0 5
        %1114 = vperm.xlu0 %1113, %v963
        %v1115 = vpop.permute.xlu0 %1114
        %1117 = vset.pattern.permute.xlu0 5
        %1118 = vperm.xlu0 %1117, %v964
        %v1119 = vpop.permute.xlu0 %1118
        %v1121 = vlaneseq
        %v1122 = vshrl.u32 %v1121, 7
        %v1123 = vsub.s32 5, %v1122
        %v1124 = vrot.slane %v348, %v1123
        %v1125 = vmul.f32 %v1107, %v1124
        %v1126 = vmul.f32 %v1111, %v1124
        %v1127 = vmul.f32 %v1115, %v1124
        %v1128 = vmul.f32 %v1119, %v1124
        %v1129 = vadd.f32 %v1101, %v1125
        %v1130 = vadd.f32 %v1102, %v1126
        %v1131 = vadd.f32 %v1103, %v1127
        %v1132 = vadd.f32 %v1104, %v1128
        %1133 = vset.pattern.permute.xlu0 6
        %1134 = vperm.xlu0 %1133, %v961
        %v1135 = vpop.permute.xlu0 %1134
        %1137 = vset.pattern.permute.xlu0 6
        %1138 = vperm.xlu0 %1137, %v962
        %v1139 = vpop.permute.xlu0 %1138
        %1141 = vset.pattern.permute.xlu0 6
        %1142 = vperm.xlu0 %1141, %v963
        %v1143 = vpop.permute.xlu0 %1142
        %1145 = vset.pattern.permute.xlu0 6
        %1146 = vperm.xlu0 %1145, %v964
        %v1147 = vpop.permute.xlu0 %1146
        %v1149 = vlaneseq
        %v1150 = vshrl.u32 %v1149, 7
        %v1151 = vsub.s32 6, %v1150
        %v1152 = vrot.slane %v348, %v1151
        %v1153 = vmul.f32 %v1135, %v1152
        %v1154 = vmul.f32 %v1139, %v1152
        %v1155 = vmul.f32 %v1143, %v1152
        %v1156 = vmul.f32 %v1147, %v1152
        %v1157 = vadd.f32 %v1129, %v1153
        %v1158 = vadd.f32 %v1130, %v1154
        %v1159 = vadd.f32 %v1131, %v1155
        %v1160 = vadd.f32 %v1132, %v1156
        %1161 = vset.pattern.permute.xlu0 7
        %1162 = vperm.xlu0 %1161, %v961
        %v1163 = vpop.permute.xlu0 %1162
        %1165 = vset.pattern.permute.xlu0 7
        %1166 = vperm.xlu0 %1165, %v962
        %v1167 = vpop.permute.xlu0 %1166
        %1169 = vset.pattern.permute.xlu0 7
        %1170 = vperm.xlu0 %1169, %v963
        %v1171 = vpop.permute.xlu0 %1170
        %1173 = vset.pattern.permute.xlu0 7
        %1174 = vperm.xlu0 %1173, %v964
        %v1175 = vpop.permute.xlu0 %1174
        %v1177 = vlaneseq
        %v1178 = vshrl.u32 %v1177, 7
        %v1179 = vsub.s32 7, %v1178
        %v1180 = vrot.slane %v348, %v1179
        %v1181 = vmul.f32 %v1163, %v1180
        %v1182 = vmul.f32 %v1167, %v1180
        %v1183 = vmul.f32 %v1171, %v1180
        %v1184 = vmul.f32 %v1175, %v1180
        %v1185 = vadd.f32 %v1157, %v1181
        %v1186 = vadd.f32 %v1158, %v1182
        %v1187 = vadd.f32 %v1159, %v1183
        %v1188 = vadd.f32 %v1160, %v1184
        %v1189 = vlaneseq
        %v1190 = vshrl.u32 %v1189, 7
        %v1191 = vsub.s32 5, %v1190
        %v1192 = vrot.slane %v349, %v1191
        %v1193 = vadd.f32 %v1185, %v1192
        %v1194 = vadd.f32 %v1186, %v1192
        %v1195 = vadd.f32 %v1187, %v1192
        %v1196 = vadd.f32 %v1188, %v1192
        %1198 = vset.pattern.permute.xlu0 0
        %1199 = vperm.xlu0 %1198, %v918
        %v1200 = vpop.permute.xlu0 %1199
        %1203 = vset.pattern.permute.xlu0 0
        %1204 = vperm.xlu0 %1203, %v920
        %v1205 = vpop.permute.xlu0 %1204
        %1208 = vset.pattern.permute.xlu0 0
        %1209 = vperm.xlu0 %1208, %v922
        %v1210 = vpop.permute.xlu0 %1209
        %1213 = vset.pattern.permute.xlu0 0
        %1214 = vperm.xlu0 %1213, %v924
        %v1215 = vpop.permute.xlu0 %1214
        %v1217 = vmul.f32 %v1200, %v1193
        %v1218 = vmul.f32 %v1205, %v1194
        %v1219 = vmul.f32 %v1210, %v1195
        %v1220 = vmul.f32 %v1215, %v1196
        %v1221 = vsel %vm616, %v1217, 0.0
        %v1222 = vsel %vm616, %v1218, 0.0
        %v1223 = vadd.f32 %v1221, %v1222
        %v1224 = vsel %vm616, %v1219, 0.0
        %v1225 = vadd.f32 %v1223, %v1224
        %v1226 = vsel %vm616, %v1220, 0.0
        %v1227 = vadd.f32 %v1225, %v1226
        %1229 = vset.pattern.permute.xlu0 0
        %1230 = vperm.xlu0 %1229, %v932
        %v1231 = vpop.permute.xlu0 %1230
        %v1233 = vmul.f32 %v1227, %v1231
        %1234 = vset.pattern.permute.xlu0 1
        %1235 = vperm.xlu0 %1234, %v918
        %v1236 = vpop.permute.xlu0 %1235
        %1238 = vset.pattern.permute.xlu0 1
        %1239 = vperm.xlu0 %1238, %v920
        %v1240 = vpop.permute.xlu0 %1239
        %1242 = vset.pattern.permute.xlu0 1
        %1243 = vperm.xlu0 %1242, %v922
        %v1244 = vpop.permute.xlu0 %1243
        %1246 = vset.pattern.permute.xlu0 1
        %1247 = vperm.xlu0 %1246, %v924
        %v1248 = vpop.permute.xlu0 %1247
        %v1250 = vmul.f32 %v1236, %v1193
        %v1251 = vmul.f32 %v1240, %v1194
        %v1252 = vmul.f32 %v1244, %v1195
        %v1253 = vmul.f32 %v1248, %v1196
        %v1254 = vsel %vm616, %v1250, 0.0
        %v1255 = vsel %vm616, %v1251, 0.0
        %v1256 = vadd.f32 %v1254, %v1255
        %v1257 = vsel %vm616, %v1252, 0.0
        %v1258 = vadd.f32 %v1256, %v1257
        %v1259 = vsel %vm616, %v1253, 0.0
        %v1260 = vadd.f32 %v1258, %v1259
        %1261 = vset.pattern.permute.xlu0 1
        %1262 = vperm.xlu0 %1261, %v932
        %v1263 = vpop.permute.xlu0 %1262
        %v1265 = vmul.f32 %v1260, %v1263
        %1266 = vset.pattern.permute.xlu0 2
        %1267 = vperm.xlu0 %1266, %v918
        %v1268 = vpop.permute.xlu0 %1267
        %1270 = vset.pattern.permute.xlu0 2
        %1271 = vperm.xlu0 %1270, %v920
        %v1272 = vpop.permute.xlu0 %1271
        %1274 = vset.pattern.permute.xlu0 2
        %1275 = vperm.xlu0 %1274, %v922
        %v1276 = vpop.permute.xlu0 %1275
        %1278 = vset.pattern.permute.xlu0 2
        %1279 = vperm.xlu0 %1278, %v924
        %v1280 = vpop.permute.xlu0 %1279
        %v1282 = vmul.f32 %v1268, %v1193
        %v1283 = vmul.f32 %v1272, %v1194
        %v1284 = vmul.f32 %v1276, %v1195
        %v1285 = vmul.f32 %v1280, %v1196
        %v1286 = vsel %vm616, %v1282, 0.0
        %v1287 = vsel %vm616, %v1283, 0.0
        %v1288 = vadd.f32 %v1286, %v1287
        %v1289 = vsel %vm616, %v1284, 0.0
        %v1290 = vadd.f32 %v1288, %v1289
        %v1291 = vsel %vm616, %v1285, 0.0
        %v1292 = vadd.f32 %v1290, %v1291
        %1293 = vset.pattern.permute.xlu0 2
        %1294 = vperm.xlu0 %1293, %v932
        %v1295 = vpop.permute.xlu0 %1294
        %v1297 = vmul.f32 %v1292, %v1295
        %1298 = vset.pattern.permute.xlu0 3
        %1299 = vperm.xlu0 %1298, %v918
        %v1300 = vpop.permute.xlu0 %1299
        %1302 = vset.pattern.permute.xlu0 3
        %1303 = vperm.xlu0 %1302, %v920
        %v1304 = vpop.permute.xlu0 %1303
        %1306 = vset.pattern.permute.xlu0 3
        %1307 = vperm.xlu0 %1306, %v922
        %v1308 = vpop.permute.xlu0 %1307
        %1310 = vset.pattern.permute.xlu0 3
        %1311 = vperm.xlu0 %1310, %v924
        %v1312 = vpop.permute.xlu0 %1311
        %v1314 = vmul.f32 %v1300, %v1193
        %v1315 = vmul.f32 %v1304, %v1194
        %v1316 = vmul.f32 %v1308, %v1195
        %v1317 = vmul.f32 %v1312, %v1196
        %v1318 = vsel %vm616, %v1314, 0.0
        %v1319 = vsel %vm616, %v1315, 0.0
        %v1320 = vadd.f32 %v1318, %v1319
        %v1321 = vsel %vm616, %v1316, 0.0
        %v1322 = vadd.f32 %v1320, %v1321
        %v1323 = vsel %vm616, %v1317, 0.0
        %v1324 = vadd.f32 %v1322, %v1323
        %1325 = vset.pattern.permute.xlu0 3
        %1326 = vperm.xlu0 %1325, %v932
        %v1327 = vpop.permute.xlu0 %1326
        %v1329 = vmul.f32 %v1324, %v1327
        %1331 = vrot.lane.b32.xlu0 %v1265, 8
        %v1332 = vpop.permute.xlu0 %1331
        %1335 = vrot.lane.b32.xlu0 %v1297, 16
        %v1336 = vpop.permute.xlu0 %1335
        %1339 = vrot.lane.b32.xlu0 %v1329, 24
        %v1340 = vpop.permute.xlu0 %1339
        %v1342 = vsel %vm616, %v1233, %v1332
        %vm1343 = vcmask 130048
        %v1344 = vsel %vm1343, %v1342, %v1336
        %vm1345 = vcmask 195584
        %v1346 = vsel %vm1345, %v1344, %v1340
        %vm1347 = vcmask 261120
        %1348 = vst.msk [vmem:[%s284] sm:$0xff] %vm1347, %v1346
        %s1349 = sand.u32 %s163, 1
        %s1350 = scalar_lea.sflag [#allocation4], %s1349
        %s1351 = sand.u32 %s163, 1
        %s1352 = smul.addr %s1351, 8
        %s1353 = scalar_lea.vmem [#allocation7], %s1352
        // Predicated region
        $region53: #{tpu_custom_call.1} parent=43 // pred_check
          %p1354 = pneg %p173
        $region54: #{tpu_custom_call.1} parent=43 // pred_check_branch
          %1356 = sbr.rel (%p1354) target = $region56
        $region55: #{tpu_custom_call.1} parent=43 // pred_region
          %s1358 = ssub.s32 128, 128
          %1359 = vsyncadd %s1350, %s1358
          %s1360 = smul.addr %s24, 128
          %s1361 = scalar_lea.hbm %s6, %s1360
          %s1363 = sshll.u32 %s1353, 4
          %s1364 = int_to_ptr.vmem [resolvable:$true] %s1363
          %1366 = dma.vmem_to_hbm [thread:$0]  %s1364, 128, %s1361, %s1350
        $region56: #{tpu_custom_call.1} parent=43 // pred_fallthru
          _
      $region44: #{tpu_custom_call.1} parent=5 // pred_fallthru
        _
      %p1367 = scmp.le.s32.totalorder 2, %s19
      // Predicated region
      $region57: #{tpu_custom_call.1} parent=5 // pred_check
        %p1368 = pneg %p1367
      $region58: #{tpu_custom_call.1} parent=5 // pred_check_branch
        %1370 = sbr.rel (%p1368) target = $region60
      $region59: #{tpu_custom_call.1} parent=5 // pred_region
        %s1371 = ssub.s32 %s19, 2
        // Predicated region
        $region61: #{tpu_custom_call.1} parent=59 // pred_check
          %p1372 = pneg %p179
        $region62: #{tpu_custom_call.1} parent=59 // pred_check_branch
          %1374 = sbr.rel (%p1372) target = $region64
        $region63: #{tpu_custom_call.1} parent=59 // pred_region
          %s1375 = sand.u32 %s164, 1
          %s1376 = scalar_lea.sflag [#allocation4], %s1375
          %s1377 = sand.u32 %s164, 1
          %s1378 = smul.addr %s1377, 8
          %s1379 = scalar_lea.vmem [#allocation7], %s1378
          %1380 = dma.done %s1376, 128
        $region64: #{tpu_custom_call.1} parent=59 // pred_fallthru
          _
      $region60: #{tpu_custom_call.1} parent=5 // pred_fallthru
        _
    $region6: #{tpu_custom_call.1} parent=1 // loop_footer
      %s23 = sadd.s32 1, %s19
    $region7: #{tpu_custom_call.1} parent=1 // loop_footer_branch
      %18 = sbr.rel target = $region3
    $region8: #{tpu_custom_call.1} parent=1 // loop_exit
      _
    %1381 = vsyncpa [#allocation3], 1
    %s1382 = scalar_lea.sflag [#allocation3], 1
    %1383 = vsyncpa %s1382, 1
    %1384 = vsyncpa [#allocation6], 1
    %1385 = vsyncpa [#allocation4], 1
    %s1386 = scalar_lea.sflag [#allocation4], 1
    %1387 = vsyncpa %s1386, 1

</llo_original>
